<compile_context>
chip_gen: v6e
topology: v6e:2x2x1
jax: 0.10.0
libtpu: 0.0.40
codegen_flags: <defaults>
</compile_context>

<pallas_src>
import functools
import math

import jax
import jax.numpy as jnp
import numpy as np
from jax import lax
from jax.experimental import pallas as pl
from jax.experimental.pallas import tpu as pltpu

LRELU_SLOPE = 0.2
HEAD_PAD = 128  # lane-dense width of the merged head output


# ------------------------------------------------------------------ Pallas kernel

def _lrelu(x):
    # valid for 0 < slope < 1
    return jnp.maximum(x, LRELU_SLOPE * x)


def _fused_kernel(n_sel, p1_ref, w1_ref, *refs):
    # refs = (S_1, W_1, ..., S_n, W_n, w4wide, mask4, f4, wh, bh, out, patch_scratch_1..n)
    sel_refs = refs[:2 * n_sel]
    w4_ref, m4_ref, f4_ref, wh_ref, bh_ref = refs[2 * n_sel:2 * n_sel + 5]
    out_ref = refs[2 * n_sel + 5]
    patch_refs = refs[2 * n_sel + 6:]

    # ---- first res block: one matmul over wrapper-built im2col patches (shortcut folded)
    z = jnp.dot(p1_ref[0], w1_ref[...], preferred_element_type=jnp.float32)
    a = _lrelu(z).astype(jnp.bfloat16)                       # (HW1, C1)

    # ---- remaining 3x3 res blocks: 2 MXU issues per layer
    for l in range(n_sel):
        s_ref, w_ref = sel_refs[2 * l], sel_refs[2 * l + 1]
        p_ref = patch_refs[l]
        hw_out = p_ref.shape[0]
        cin = a.shape[1]
        # stacked per-image gather (tap-major rows); 0/1 selection -> exact copy rows
        g = jnp.dot(s_ref[...], a, preferred_element_type=jnp.float32)   # (9*HoWo, Cin)
        # contiguous "reshape" (9*HoWo, Cin) -> (HoWo, 9*Cin) via static VMEM stores
        for t in range(9):
            p_ref[:, t * cin:(t + 1) * cin] = g[t * hw_out:(t + 1) * hw_out, :]
        z = jnp.dot(p_ref[...].astype(jnp.bfloat16), w_ref[...],
                    preferred_element_type=jnp.float32)      # (HoWo, Cout), K = 9*Cin
        a = _lrelu(z).astype(jnp.bfloat16)

    # ---- initial 4x4 block (4x4 -> 1x1): one wide matmul + block-diag mask + f32 fold
    q = jnp.dot(a, w4_ref[...], preferred_element_type=jnp.float32)      # (16, 16*C4)
    part = jnp.sum(q * m4_ref[...], axis=0, keepdims=True)               # (1, 16*C4)
    z4 = jnp.dot(part, f4_ref[...], preferred_element_type=jnp.float32)  # (1, C4), exact fold
    a4 = _lrelu(z4).astype(jnp.bfloat16)

    # ---- merged heads: one 128-lane-dense matmul, bias added in f32
    out = jnp.dot(a4, wh_ref[...], preferred_element_type=jnp.float32) + bh_ref[...]
    out_ref[0] = out.astype(out_ref.dtype)


# ------------------------------------------------------------------ wrapper / prep

def _im2col_first(x_nhwc, k, stride, pad, k_cols):
    """Per-image im2col for the first layer only (tiny; fused by XLA with the transpose)."""
    x = jnp.pad(x_nhwc, ((0, 0), (pad, pad), (pad, pad), (0, 0)))
    n, h, w, c = x.shape
    ho = (h - k) // stride + 1
    wo = (w - k) // stride + 1
    cols = []
    for i in range(k):
        for j in range(k):
            cols.append(x[:, i:i + (ho - 1) * stride + 1:stride,
                             j:j + (wo - 1) * stride + 1:stride, :])
    p = jnp.stack(cols, axis=3).reshape(n, ho * wo, k * k * c)
    if k_cols > k * k * c:
        p = jnp.pad(p, ((0, 0), (0, 0), (0, k_cols - k * k * c)))
    return p.astype(jnp.bfloat16)


def _selection_stacked(h_in, w_in, k, stride, pad):
    """Per-image tap-major stacked 0/1 selection matrix (k*k*HoWo, HiWi)."""
    h_out = (h_in + 2 * pad - k) // stride + 1
    w_out = (w_in + 2 * pad - k) // stride + 1
    hw_out = h_out * w_out
    s = np.zeros((k * k * hw_out, h_in * w_in), np.float32)
    for i in range(k):
        for j in range(k):
            t = i * k + j
            for a in range(h_out):
                for b in range(w_out):
                    ih = stride * a + i - pad
                    iw = stride * b + j - pad
                    if 0 <= ih < h_in and 0 <= iw < w_in:
                        s[t * hw_out + a * w_out + b, ih * w_in + iw] = 1.0
    return s, h_out


def build_block_cfgs(ndf, sub_res):
    # mirrors Discriminator.__init__ block construction (DResidualBlock instances)
    cfgs = [dict(kind='initial', cin=ndf, cout=ndf, k=4, stride=1, pad=0)]
    for d in range(2, int(math.log2(sub_res)) - 1):
        if d < 3:
            in_ch, out_ch = ndf, ndf
        else:
            in_ch, out_ch = ndf // 2 ** (d - 2), ndf // 2 ** (d - 3)
        cfgs.append(dict(kind='res', cin=in_ch, cout=out_ch, k=3, stride=2, pad=1))
    d = int(math.log2(sub_res)) - 2
    out_out_ch = ndf if d < 3 else ndf // 2 ** (d - 2)
    cfgs.append(dict(kind='res', cin=3, cout=out_out_ch, k=3, stride=2, pad=1))
    return cfgs


def init_params(key, ndf, label_size, sub_res):
    # deterministic synthetic init ~ N(0, 0.02); HWIO conv weights, bias-free convs
    cfgs = build_block_cfgs(ndf, sub_res)
    params = {'blocks': []}
    for cfg in cfgs:
        key, k1, k2 = jax.random.split(key, 3)
        w = 0.02 * jax.random.normal(
            k1, (cfg['k'], cfg['k'], cfg['cin'], cfg['cout']), jnp.float32)
        bp = {'w': w}
        if cfg['kind'] == 'res':
            bp['ws'] = 0.02 * jax.random.normal(
                k2, (cfg['cin'], cfg['cout']), jnp.float32)  # 1x1 shortcut conv
        params['blocks'].append(bp)
    key, k1, k2, k3, k4 = jax.random.split(key, 5)
    params['wv'] = 0.02 * jax.random.normal(k1, (ndf, 1), jnp.float32)
    params['bv'] = 0.02 * jax.random.normal(k2, (1, 1), jnp.float32)
    params['wc'] = 0.02 * jax.random.normal(k3, (ndf, label_size), jnp.float32)
    params['bc'] = 0.02 * jax.random.normal(k4, (1, label_size), jnp.float32)
    return cfgs, params


def prepare_fused(cfgs, params, sub_res, label_size):
    """One-time (outside jit) weight preprocessing for the fused kernel."""
    exec_list = list(reversed(list(zip(cfgs, params['blocks']))))  # forward order
    cfg0, bp0 = exec_list[0]
    assert cfg0['kind'] == 'res'
    k, s0, p0, cin0, cout0 = cfg0['k'], cfg0['stride'], cfg0['pad'], cfg0['cin'], cfg0['cout']

    # first layer: fold 1x1 shortcut into the center tap, pad contraction dim to x16
    k_cols = -(-(k * k * cin0) // 16) * 16
    w1 = bp0['w'].astype(jnp.float32).reshape(k * k * cin0, cout0)
    ctr = ((k // 2) * k + (k // 2)) * cin0
    w1 = w1.at[ctr:ctr + cin0].add(bp0['ws'].astype(jnp.float32))
    w1 = jnp.pad(w1, ((0, k_cols - k * k * cin0), (0, 0))).astype(jnp.bfloat16)

    h = (sub_res + 2 * p0 - k) // s0 + 1
    const_ops = [w1]
    scratch_shapes = []
    n_sel = 0
    for cfg, bp in exec_list[1:-1]:
        assert cfg['kind'] == 'res' and cfg['k'] == 3
        sel, h = _selection_stacked(h, h, 3, cfg['stride'], cfg['pad'])
        wt = bp['w'].astype(jnp.float32).reshape(9 * cfg['cin'], cfg['cout'])
        # fold 1x1 strided shortcut into the center tap (exact for k=3, pad=1)
        wt = wt.at[4 * cfg['cin']:5 * cfg['cin']].add(bp['ws'].astype(jnp.float32))
        const_ops += [jnp.asarray(sel, jnp.bfloat16), wt.astype(jnp.bfloat16)]
        scratch_shapes.append((h * h, 9 * cfg['cin']))
        n_sel += 1

    cfgl, bpl = exec_list[-1]
    assert cfgl['kind'] == 'initial' and cfgl['k'] == h, \
        "initial 4x4 block must reduce spatial dims to 1x1"
    hw4, cin4, cout4 = h * h, cfgl['cin'], cfgl['cout']
    w4wide = bpl['w'].astype(jnp.float32).reshape(hw4, cin4, cout4) \
        .transpose(1, 0, 2).reshape(cin4, hw4 * cout4).astype(jnp.bfloat16)
    mask4 = np.zeros((hw4, hw4 * cout4), np.float32)
    for s in range(hw4):
        mask4[s, s * cout4:(s + 1) * cout4] = 1.0
    f4 = np.tile(np.eye(cout4, dtype=np.float32), (hw4, 1))        # (hw4*cout4, cout4)
    const_ops += [w4wide, jnp.asarray(mask4), jnp.asarray(f4)]

    # merged heads, lane-padded to 128
    wh = jnp.concatenate([params['wv'], params['wc']], axis=1)
    assert wh.shape[1] <= HEAD_PAD
    wh = jnp.pad(wh, ((0, 0), (0, HEAD_PAD - wh.shape[1]))).astype(jnp.bfloat16)
    bh = jnp.concatenate([params['bv'], params['bc']], axis=1)
    bh = jnp.pad(bh, ((0, 0), (0, HEAD_PAD - bh.shape[1]))).astype(jnp.float32)
    const_ops += [wh, bh]

    meta = dict(k=k, stride=s0, pad=p0, k_pad=k_cols, n_sel=n_sel,
                scratch_shapes=tuple(scratch_shapes), label_size=label_size)
    return meta, tuple(const_ops)


def _const_spec(shape):
    nd = len(shape)
    return pl.BlockSpec(shape, lambda b, _nd=nd: (0,) * _nd)


def fused_forward(meta, const_ops, x_nchw):
    x = jnp.transpose(x_nchw, (0, 2, 3, 1))  # NCHW -> NHWC
    patches = _im2col_first(x, meta['k'], meta['stride'], meta['pad'], meta['k_pad'])
    batch = patches.shape[0]

    operands = (patches,) + tuple(const_ops)
    in_specs = [pl.BlockSpec((1,) + patches.shape[1:], lambda b: (b, 0, 0))]
    in_specs += [_const_spec(op.shape) for op in const_ops]
    out_spec = pl.BlockSpec((1, 1, HEAD_PAD), lambda b: (b, 0, 0))
    scratch = [pltpu.VMEM(s, jnp.float32) for s in meta['scratch_shapes']]

    out3 = pl.pallas_call(
        functools.partial(_fused_kernel, meta['n_sel']),
        out_shape=jax.ShapeDtypeStruct((batch, 1, HEAD_PAD), jnp.float32),
        grid=(batch,),
        in_specs=in_specs,
        out_specs=out_spec,
        scratch_shapes=scratch,
        compiler_params=pltpu.CompilerParams(
            dimension_semantics=("parallel",),
            vmem_limit_bytes=32 * 1024 * 1024),
    )(*operands)

    out = out3[:, 0, :]
    validity = out[:, 0:1]
    cls = out[:, 1:1 + meta['label_size']]
    return validity, cls


# ------------------------------------------------------------------ pure-JAX reference

def _conv_ref(x, w, stride, pad):
    return lax.conv_general_dilated(
        x, w, window_strides=(stride, stride),
        padding=((pad, pad), (pad, pad)),
        dimension_numbers=('NHWC', 'HWIO', 'NHWC'))


def reference_forward(cfgs, params, x_nchw):
    x = jnp.transpose(x_nchw, (0, 2, 3, 1))
    for cfg, bp in reversed(list(zip(cfgs, params['blocks']))):
        out = _conv_ref(x, bp['w'], cfg['stride'], cfg['pad'])
        if cfg['kind'] == 'res':
            ws4 = bp['ws'].reshape(1, 1, cfg['cin'], cfg['cout'])
            out = out + _conv_ref(x, ws4, cfg['stride'], 0)
        x = jnp.where(out > 0, out, LRELU_SLOPE * out)
    feats = x.reshape(x.shape[0], -1)  # spatial is 1x1 -> identical to NCHW flatten
    val = feats @ params['wv'] + params['bv']
    cls = feats @ params['wc'] + params['bc']
    return val, cls


# ------------------------------------------------------------------ main

if __name__ == "__main__":
    # small config consistent with the module: ndf=32, label_size=8, sub_res=16, batch=2
    ndf, label_size, sub_res, batch = 32, 8, 16, 2

    key = jax.random.PRNGKey(0)
    kp, kx = jax.random.split(key)
    cfgs, params = init_params(kp, ndf, label_size, sub_res)
    x = jax.random.normal(kx, (batch, 3, sub_res, sub_res), jnp.float32)  # NCHW like PyTorch

    meta, const_ops = prepare_fused(cfgs, params, sub_res, label_size)
    fwd = jax.jit(functools.partial(fused_forward, meta))
    validity, cls = fwd(const_ops, x)
    jax.block_until_ready((validity, cls))

    assert validity.shape == (batch, 1), validity.shape
    assert cls.shape == (batch, label_size), cls.shape

    ref_val, ref_cls = reference_forward(cfgs, params, x)
    # bf16 MXU operands vs. f32 reference -> loosened tolerances
    assert jnp.allclose(validity, ref_val, atol=2e-3, rtol=2e-2), \
        float(jnp.max(jnp.abs(validity - ref_val)))
    assert jnp.allclose(cls, ref_cls, atol=2e-3, rtol=2e-2), \
        float(jnp.max(jnp.abs(cls - ref_cls)))

    print("KERNEL_OK")
</pallas_src>

<mosaic_0001>
module attributes {stable_mosaic.version = 11 : i64} {
  func.func @_fused_kernel(%arg0: i32, %arg1: memref<1x64x32xbf16, #tpu.memory_space<vmem>>, %arg2: memref<32x32xbf16, #tpu.memory_space<vmem>>, %arg3: memref<144x64xbf16, #tpu.memory_space<vmem>>, %arg4: memref<288x32xbf16, #tpu.memory_space<vmem>>, %arg5: memref<32x512xbf16, #tpu.memory_space<vmem>>, %arg6: memref<16x512xf32, #tpu.memory_space<vmem>>, %arg7: memref<512x32xf32, #tpu.memory_space<vmem>>, %arg8: memref<32x128xbf16, #tpu.memory_space<vmem>>, %arg9: memref<1x128xf32, #tpu.memory_space<vmem>>, %arg10: memref<1x1x128xf32, #tpu.memory_space<vmem>>, %arg11: memref<16x288xf32, #tpu.memory_space<vmem>>) attributes {dimension_semantics = [#tpu.dimension_semantics<parallel>], iteration_bounds = array<i64: 2>, scalar_prefetch = 0 : i64, scratch_operands = 1 : i64, tpu.core_type = #tpu.core_type<tc>, window_params = [{transform_indices = @transform_0, window_bounds = array<i64: 1, 64, 32>}, {pipeline_mode = #tpu.pipeline_mode<synchronous>, transform_indices = @transform_1, window_bounds = array<i64: 32, 32>}, {pipeline_mode = #tpu.pipeline_mode<synchronous>, transform_indices = @transform_2, window_bounds = array<i64: 144, 64>}, {pipeline_mode = #tpu.pipeline_mode<synchronous>, transform_indices = @transform_3, window_bounds = array<i64: 288, 32>}, {pipeline_mode = #tpu.pipeline_mode<synchronous>, transform_indices = @transform_4, window_bounds = array<i64: 32, 512>}, {pipeline_mode = #tpu.pipeline_mode<synchronous>, transform_indices = @transform_5, window_bounds = array<i64: 16, 512>}, {pipeline_mode = #tpu.pipeline_mode<synchronous>, transform_indices = @transform_6, window_bounds = array<i64: 512, 32>}, {pipeline_mode = #tpu.pipeline_mode<synchronous>, transform_indices = @transform_7, window_bounds = array<i64: 32, 128>}, {pipeline_mode = #tpu.pipeline_mode<synchronous>, transform_indices = @transform_8, window_bounds = array<i64: 1, 128>}, {transform_indices = @transform_9, window_bounds = array<i64: 1, 1, 128>}]} {
    %c0 = arith.constant 0 : index
    %c0_0 = arith.constant 0 : index
    %c0_1 = arith.constant 0 : index
    %0 = vector.load %arg1[%c0, %c0_0, %c0_1] : memref<1x64x32xbf16, #tpu.memory_space<vmem>>, vector<1x64x32xbf16>
    %1 = vector.shape_cast %0 : vector<1x64x32xbf16> to vector<64x32xbf16>
    %c0_2 = arith.constant 0 : index
    %c0_3 = arith.constant 0 : index
    %2 = vector.load %arg2[%c0_2, %c0_3] : memref<32x32xbf16, #tpu.memory_space<vmem>>, vector<32x32xbf16>
    %cst = arith.constant dense<0.000000e+00> : vector<64x32xf32>
    %3 = tpu.matmul %1, %2, %cst {dimension_numbers = #tpu.dot_dimension_numbers<[1], [0], [0], [1], [0, 0, 1, 1], [], []>} : vector<64x32xbf16>, vector<32x32xbf16>, vector<64x32xf32> -> vector<64x32xf32>
    %cst_4 = arith.constant 2.000000e-01 : f32
    %4 = vector.broadcast %cst_4 : f32 to vector<64x32xf32>
    %5 = arith.mulf %4, %3 : vector<64x32xf32>
    %6 = arith.maximumf %3, %5 : vector<64x32xf32>
    %7 = arith.truncf %6 : vector<64x32xf32> to vector<64x32xbf16>
    %c0_5 = arith.constant 0 : index
    %c0_6 = arith.constant 0 : index
    %8 = vector.load %arg3[%c0_5, %c0_6] : memref<144x64xbf16, #tpu.memory_space<vmem>>, vector<144x64xbf16>
    %cst_7 = arith.constant dense<0.000000e+00> : vector<144x32xf32>
    %9 = tpu.matmul %8, %7, %cst_7 {dimension_numbers = #tpu.dot_dimension_numbers<[1], [0], [0], [1], [0, 0, 1, 1], [], []>} : vector<144x64xbf16>, vector<64x32xbf16>, vector<144x32xf32> -> vector<144x32xf32>
    %10 = vector.extract_strided_slice %9 {offsets = [0, 0], sizes = [16, 32], strides = [1, 1]} : vector<144x32xf32> to vector<16x32xf32>
    %c0_8 = arith.constant 0 : index
    %c0_9 = arith.constant 0 : index
    %11 = vector.load %arg11[%c0_8, %c0_9] : memref<16x288xf32, #tpu.memory_space<vmem>>, vector<16x32xf32>
    tpu.vector_store %arg11[%c0_8, %c0_9], %10 {strides = array<i32>} : memref<16x288xf32, #tpu.memory_space<vmem>>, vector<16x32xf32>,
    %12 = vector.extract_strided_slice %9 {offsets = [16, 0], sizes = [16, 32], strides = [1, 1]} : vector<144x32xf32> to vector<16x32xf32>
    %c0_10 = arith.constant 0 : index
    %c32 = arith.constant 32 : index
    %13 = vector.load %arg11[%c0_10, %c32] : memref<16x288xf32, #tpu.memory_space<vmem>>, vector<16x32xf32>
    tpu.vector_store %arg11[%c0_10, %c32], %12 {strides = array<i32>} : memref<16x288xf32, #tpu.memory_space<vmem>>, vector<16x32xf32>,
    %14 = vector.extract_strided_slice %9 {offsets = [32, 0], sizes = [16, 32], strides = [1, 1]} : vector<144x32xf32> to vector<16x32xf32>
    %c0_11 = arith.constant 0 : index
    %c64 = arith.constant 64 : index
    %15 = vector.load %arg11[%c0_11, %c64] : memref<16x288xf32, #tpu.memory_space<vmem>>, vector<16x32xf32>
    tpu.vector_store %arg11[%c0_11, %c64], %14 {strides = array<i32>} : memref<16x288xf32, #tpu.memory_space<vmem>>, vector<16x32xf32>,
    %16 = vector.extract_strided_slice %9 {offsets = [48, 0], sizes = [16, 32], strides = [1, 1]} : vector<144x32xf32> to vector<16x32xf32>
    %c0_12 = arith.constant 0 : index
    %c96 = arith.constant 96 : index
    %17 = vector.load %arg11[%c0_12, %c96] : memref<16x288xf32, #tpu.memory_space<vmem>>, vector<16x32xf32>
    tpu.vector_store %arg11[%c0_12, %c96], %16 {strides = array<i32>} : memref<16x288xf32, #tpu.memory_space<vmem>>, vector<16x32xf32>,
    %18 = vector.extract_strided_slice %9 {offsets = [64, 0], sizes = [16, 32], strides = [1, 1]} : vector<144x32xf32> to vector<16x32xf32>
    %c0_13 = arith.constant 0 : index
    %c128 = arith.constant 128 : index
    %19 = vector.load %arg11[%c0_13, %c128] : memref<16x288xf32, #tpu.memory_space<vmem>>, vector<16x32xf32>
    tpu.vector_store %arg11[%c0_13, %c128], %18 {strides = array<i32>} : memref<16x288xf32, #tpu.memory_space<vmem>>, vector<16x32xf32>,
    %20 = vector.extract_strided_slice %9 {offsets = [80, 0], sizes = [16, 32], strides = [1, 1]} : vector<144x32xf32> to vector<16x32xf32>
    %c0_14 = arith.constant 0 : index
    %c160 = arith.constant 160 : index
    %21 = vector.load %arg11[%c0_14, %c160] : memref<16x288xf32, #tpu.memory_space<vmem>>, vector<16x32xf32>
    tpu.vector_store %arg11[%c0_14, %c160], %20 {strides = array<i32>} : memref<16x288xf32, #tpu.memory_space<vmem>>, vector<16x32xf32>,
    %22 = vector.extract_strided_slice %9 {offsets = [96, 0], sizes = [16, 32], strides = [1, 1]} : vector<144x32xf32> to vector<16x32xf32>
    %c0_15 = arith.constant 0 : index
    %c192 = arith.constant 192 : index
    %23 = vector.load %arg11[%c0_15, %c192] : memref<16x288xf32, #tpu.memory_space<vmem>>, vector<16x32xf32>
    tpu.vector_store %arg11[%c0_15, %c192], %22 {strides = array<i32>} : memref<16x288xf32, #tpu.memory_space<vmem>>, vector<16x32xf32>,
    %24 = vector.extract_strided_slice %9 {offsets = [112, 0], sizes = [16, 32], strides = [1, 1]} : vector<144x32xf32> to vector<16x32xf32>
    %c0_16 = arith.constant 0 : index
    %c224 = arith.constant 224 : index
    %25 = vector.load %arg11[%c0_16, %c224] : memref<16x288xf32, #tpu.memory_space<vmem>>, vector<16x32xf32>
    tpu.vector_store %arg11[%c0_16, %c224], %24 {strides = array<i32>} : memref<16x288xf32, #tpu.memory_space<vmem>>, vector<16x32xf32>,
    %26 = vector.extract_strided_slice %9 {offsets = [128, 0], sizes = [16, 32], strides = [1, 1]} : vector<144x32xf32> to vector<16x32xf32>
    %c0_17 = arith.constant 0 : index
    %c256 = arith.constant 256 : index
    %27 = vector.load %arg11[%c0_17, %c256] : memref<16x288xf32, #tpu.memory_space<vmem>>, vector<16x32xf32>
    tpu.vector_store %arg11[%c0_17, %c256], %26 {strides = array<i32>} : memref<16x288xf32, #tpu.memory_space<vmem>>, vector<16x32xf32>,
    %c0_18 = arith.constant 0 : index
    %c0_19 = arith.constant 0 : index
    %28 = vector.load %arg11[%c0_18, %c0_19] : memref<16x288xf32, #tpu.memory_space<vmem>>, vector<16x288xf32>
    %29 = arith.truncf %28 : vector<16x288xf32> to vector<16x288xbf16>
    %c0_20 = arith.constant 0 : index
    %c0_21 = arith.constant 0 : index
    %30 = vector.load %arg4[%c0_20, %c0_21] : memref<288x32xbf16, #tpu.memory_space<vmem>>, vector<288x32xbf16>
    %cst_22 = arith.constant dense<0.000000e+00> : vector<16x32xf32>
    %31 = tpu.matmul %29, %30, %cst_22 {dimension_numbers = #tpu.dot_dimension_numbers<[1], [0], [0], [1], [0, 0, 1, 1], [], []>} : vector<16x288xbf16>, vector<288x32xbf16>, vector<16x32xf32> -> vector<16x32xf32>
    %cst_23 = arith.constant 2.000000e-01 : f32
    %32 = vector.broadcast %cst_23 : f32 to vector<16x32xf32>
    %33 = arith.mulf %32, %31 : vector<16x32xf32>
    %34 = arith.maximumf %31, %33 : vector<16x32xf32>
    %35 = arith.truncf %34 : vector<16x32xf32> to vector<16x32xbf16>
    %c0_24 = arith.constant 0 : index
    %c0_25 = arith.constant 0 : index
    %36 = vector.load %arg5[%c0_24, %c0_25] : memref<32x512xbf16, #tpu.memory_space<vmem>>, vector<32x512xbf16>
    %cst_26 = arith.constant dense<0.000000e+00> : vector<16x512xf32>
    %37 = tpu.matmul %35, %36, %cst_26 {dimension_numbers = #tpu.dot_dimension_numbers<[1], [0], [0], [1], [0, 0, 1, 1], [], []>} : vector<16x32xbf16>, vector<32x512xbf16>, vector<16x512xf32> -> vector<16x512xf32>
    %c0_27 = arith.constant 0 : index
    %c0_28 = arith.constant 0 : index
    %38 = vector.load %arg6[%c0_27, %c0_28] : memref<16x512xf32, #tpu.memory_space<vmem>>, vector<16x512xf32>
    %39 = arith.mulf %37, %38 : vector<16x512xf32>
    %cst_29 = arith.constant dense<0.000000e+00> : vector<512xf32>
    %40 = vector.multi_reduction <add>, %39, %cst_29 [0] : vector<16x512xf32> to vector<512xf32>
    %41 = vector.shape_cast %40 : vector<512xf32> to vector<1x512xf32>
    %c0_30 = arith.constant 0 : index
    %c0_31 = arith.constant 0 : index
    %42 = vector.load %arg7[%c0_30, %c0_31] : memref<512x32xf32, #tpu.memory_space<vmem>>, vector<512x32xf32>
    %cst_32 = arith.constant dense<0.000000e+00> : vector<1x32xf32>
    %43 = tpu.matmul %41, %42, %cst_32 {dimension_numbers = #tpu.dot_dimension_numbers<[1], [0], [0], [1], [0, 0, 1, 1], [], []>} : vector<1x512xf32>, vector<512x32xf32>, vector<1x32xf32> -> vector<1x32xf32>
    %cst_33 = arith.constant 2.000000e-01 : f32
    %44 = vector.broadcast %cst_33 : f32 to vector<1x32xf32>
    %45 = arith.mulf %44, %43 : vector<1x32xf32>
    %46 = arith.maximumf %43, %45 : vector<1x32xf32>
    %47 = arith.truncf %46 : vector<1x32xf32> to vector<1x32xbf16>
    %c0_34 = arith.constant 0 : index
    %c0_35 = arith.constant 0 : index
    %48 = vector.load %arg8[%c0_34, %c0_35] : memref<32x128xbf16, #tpu.memory_space<vmem>>, vector<32x128xbf16>
    %cst_36 = arith.constant dense<0.000000e+00> : vector<1x128xf32>
    %49 = tpu.matmul %47, %48, %cst_36 {dimension_numbers = #tpu.dot_dimension_numbers<[1], [0], [0], [1], [0, 0, 1, 1], [], []>} : vector<1x32xbf16>, vector<32x128xbf16>, vector<1x128xf32> -> vector<1x128xf32>
    %c0_37 = arith.constant 0 : index
    %c0_38 = arith.constant 0 : index
    %50 = vector.load %arg9[%c0_37, %c0_38] : memref<1x128xf32, #tpu.memory_space<vmem>>, vector<1x128xf32>
    %51 = arith.addf %49, %50 : vector<1x128xf32>
    %c0_39 = arith.constant 0 : index
    %c0_40 = arith.constant 0 : index
    %c0_41 = arith.constant 0 : index
    %52 = vector.load %arg10[%c0_39, %c0_40, %c0_41] : memref<1x1x128xf32, #tpu.memory_space<vmem>>, vector<1x1x128xf32>
    %53 = vector.shape_cast %52 : vector<1x1x128xf32> to vector<1x128xf32>
    %54 = vector.shape_cast %51 : vector<1x128xf32> to vector<1x1x128xf32>
    tpu.vector_store %arg10[%c0_39, %c0_40, %c0_41], %54 {strides = array<i32>} : memref<1x1x128xf32, #tpu.memory_space<vmem>>, vector<1x1x128xf32>,
    return
  }
  func.func @transform_0(%arg0: i32) -> (i32, i32, i32) {
    %c0_i32 = arith.constant 0 : i32
    %c0_i32_0 = arith.constant 0 : i32
    %c0_i32_1 = arith.constant 0 : i32
    return %arg0, %c0_i32, %c0_i32_0 : i32, i32, i32
  }
  func.func @transform_1(%arg0: i32) -> (i32, i32) {
    %c0_i32 = arith.constant 0 : i32
    %c0_i32_0 = arith.constant 0 : i32
    %c0_i32_1 = arith.constant 0 : i32
    return %c0_i32, %c0_i32_0 : i32, i32
  }
  func.func @transform_2(%arg0: i32) -> (i32, i32) {
    %c0_i32 = arith.constant 0 : i32
    %c0_i32_0 = arith.constant 0 : i32
    %c0_i32_1 = arith.constant 0 : i32
    return %c0_i32, %c0_i32_0 : i32, i32
  }
  func.func @transform_3(%arg0: i32) -> (i32, i32) {
    %c0_i32 = arith.constant 0 : i32
    %c0_i32_0 = arith.constant 0 : i32
    %c0_i32_1 = arith.constant 0 : i32
    return %c0_i32, %c0_i32_0 : i32, i32
  }
  func.func @transform_4(%arg0: i32) -> (i32, i32) {
    %c0_i32 = arith.constant 0 : i32
    %c0_i32_0 = arith.constant 0 : i32
    %c0_i32_1 = arith.constant 0 : i32
    return %c0_i32, %c0_i32_0 : i32, i32
  }
  func.func @transform_5(%arg0: i32) -> (i32, i32) {
    %c0_i32 = arith.constant 0 : i32
    %c0_i32_0 = arith.constant 0 : i32
    %c0_i32_1 = arith.constant 0 : i32
    return %c0_i32, %c0_i32_0 : i32, i32
  }
  func.func @transform_6(%arg0: i32) -> (i32, i32) {
    %c0_i32 = arith.constant 0 : i32
    %c0_i32_0 = arith.constant 0 : i32
    %c0_i32_1 = arith.constant 0 : i32
    return %c0_i32, %c0_i32_0 : i32, i32
  }
  func.func @transform_7(%arg0: i32) -> (i32, i32) {
    %c0_i32 = arith.constant 0 : i32
    %c0_i32_0 = arith.constant 0 : i32
    %c0_i32_1 = arith.constant 0 : i32
    return %c0_i32, %c0_i32_0 : i32, i32
  }
  func.func @transform_8(%arg0: i32) -> (i32, i32) {
    %c0_i32 = arith.constant 0 : i32
    %c0_i32_0 = arith.constant 0 : i32
    %c0_i32_1 = arith.constant 0 : i32
    return %c0_i32, %c0_i32_0 : i32, i32
  }
  func.func @transform_9(%arg0: i32) -> (i32, i32, i32) {
    %c0_i32 = arith.constant 0 : i32
    %c0_i32_0 = arith.constant 0 : i32
    %c0_i32_1 = arith.constant 0 : i32
    return %arg0, %c0_i32, %c0_i32_0 : i32, i32, i32
  }
}

</mosaic_0001>

<llo_original>
// kernel: fused_forward.1
$region0: #{fused_forward.1}
  #allocation0 [shape = 'u32[]', space=smem, size = 0x4, offset = 0x4, fixed_abs, tag = 'smem constant byte address 0x4 - core index']
  #allocation1 [shape = 'u32[144,128]{1,0:T(1,128)}', space=vmem, size = 0x12000, scoped, tag = 'internal scratch']
  #allocation2 [shape = 'f32[16,288]{1,0:T(8,128)}', space=vmem, size = 0x6000, scoped, tag = 'scratch operand']
  %s0 = inlined_call_operand.vmem [shape: bf16[2,64,32], index: 0, kind: input, shape index: {}]
  %s1 = inlined_call_operand.vmem [shape: bf16[32,32], index: 1, kind: input, shape index: {}]
  %s2 = inlined_call_operand.vmem [shape: bf16[144,64], index: 2, kind: input, shape index: {}]
  %s3 = inlined_call_operand.vmem [shape: bf16[288,32], index: 3, kind: input, shape index: {}]
  %s4 = inlined_call_operand.vmem [shape: bf16[32,512], index: 4, kind: input, shape index: {}]
  %s5 = inlined_call_operand.vmem [shape: f32[16,512], index: 5, kind: input, shape index: {}]
  %s6 = inlined_call_operand.vmem [shape: f32[512,32], index: 6, kind: input, shape index: {}]
  %s7 = inlined_call_operand.vmem [shape: bf16[32,128], index: 7, kind: input, shape index: {}]
  %s8 = inlined_call_operand.vmem [shape: f32[1,128], index: 8, kind: input, shape index: {}]
  %s9 = inlined_call_operand.vmem [shape: f32[2,1,128], index: 9, kind: output, shape index: {}]
  %s10 = sld [smem:[#allocation0]]
  $region69: #{fused_forward.1} parent=0
    _
  %s12 = ssub.s32 1, %s10
  %s13 = scalar_select 0, %s12, %s10
  loop: start=0, step=1, limit=4
  $region2: #{fused_forward.1} parent=0 // loop_pre_header
    _
  $region3: #{fused_forward.1} parent=0 // loop_header
    %s15 = sphi 0, %s19
    %p16 = scmp.ge.s32.totalorder %s15, 4
    %s25 = sphi 0, %s27
    %s28 = sphi 0, %s25
    %s29 = sphi 0, %s28
    %s45 = sphi 0, %s29
    %s49 = sphi 0, %s49
    %s51 = sphi 0, %s49
    %s52 = sphi 0, %s51
    %s66 = sphi 0, %s52
    %s70 = sphi 0, %s70
    %s72 = sphi 0, %s70
    %s73 = sphi 0, %s72
    %s87 = sphi 0, %s73
    %s91 = sphi 0, %s91
    %s93 = sphi 0, %s91
    %s94 = sphi 0, %s93
    %s108 = sphi 0, %s94
    %s112 = sphi 0, %s112
    %s114 = sphi 0, %s112
    %s115 = sphi 0, %s114
    %s129 = sphi 0, %s115
    %s133 = sphi 0, %s133
    %s135 = sphi 0, %s133
    %s136 = sphi 0, %s135
    %s150 = sphi 0, %s136
    %s154 = sphi 0, %s154
    %s156 = sphi 0, %s154
    %s157 = sphi 0, %s156
    %s171 = sphi 0, %s157
    %s175 = sphi 0, %s175
    %s177 = sphi 0, %s175
    %s178 = sphi 0, %s177
    %s192 = sphi 0, %s178
    %s196 = sphi 0, %s196
    %s198 = sphi 0, %s196
    %s199 = sphi 0, %s198
    %s213 = sphi 0, %s199
    %s219 = sphi 0, %s221
    %s222 = sphi 0, %s219
    %s223 = sphi 0, %s222
    %s239 = sphi 0, %s223
  $region4: #{fused_forward.1} parent=0 // loop_header_branch
    %18 = sbr.rel (%p16) target = $region8
  $region5: #{fused_forward.1} parent=0 // loop_body
    %s20 = ssub.s32 %s15, 1
    %s21 = ssub.s32 %s15, 2
    %s22 = sadd.s32 %s15, 1
    %s23 = ssub.s32 %s15, %s22
    %p24 = scmp.eq.s32.totalorder %s23, 0
    %s26 = sadd.s32 %s25, 1
    %s27 = scalar_select %p24, %s25, %s26
    %p30 = pneg %p24
    %p31 = scmp.eq.s32.totalorder %s15, 1
    %p32 = por %p30, %p31
    %p33 = scmp.ne.s32.totalorder %s25, %s28
    %p34 = scmp.eq.s32.totalorder %s15, 0
    %p35 = por %p33, %p34
    %p36 = scmp.ne.s32.totalorder %s25, %s28
    %p37 = scmp.eq.s32.totalorder %s20, 1
    %p38 = por %p36, %p37
    %p39 = scmp.ne.s32.totalorder %s28, %s29
    %p40 = scmp.eq.s32.totalorder %s20, 0
    %p41 = por %p39, %p40
    %p42 = scmp.ne.s32.totalorder %s28, %s29
    %p43 = scmp.eq.s32.totalorder %s21, 1
    %p44 = por %p42, %p43
    %p46 = scmp.ne.s32.totalorder %s29, %s45
    %p47 = scmp.eq.s32.totalorder %s21, 0
    %p48 = por %p46, %p47
    %s50 = sadd.s32 %s49, 1
    %p53 = scmp.eq.s32.totalorder %s15, 1
    %p54 = scmp.ne.s32.totalorder %s49, %s51
    %p55 = scmp.eq.s32.totalorder %s15, 0
    %p56 = por %p54, %p55
    %p57 = scmp.ne.s32.totalorder %s49, %s51
    %p58 = scmp.eq.s32.totalorder %s20, 1
    %p59 = por %p57, %p58
    %p60 = scmp.ne.s32.totalorder %s51, %s52
    %p61 = scmp.eq.s32.totalorder %s20, 0
    %p62 = por %p60, %p61
    %p63 = scmp.ne.s32.totalorder %s51, %s52
    %p64 = scmp.eq.s32.totalorder %s21, 1
    %p65 = por %p63, %p64
    %p67 = scmp.ne.s32.totalorder %s52, %s66
    %p68 = scmp.eq.s32.totalorder %s21, 0
    %p69 = por %p67, %p68
    %s71 = sadd.s32 %s70, 1
    %p74 = scmp.eq.s32.totalorder %s15, 1
    %p75 = scmp.ne.s32.totalorder %s70, %s72
    %p76 = scmp.eq.s32.totalorder %s15, 0
    %p77 = por %p75, %p76
    %p78 = scmp.ne.s32.totalorder %s70, %s72
    %p79 = scmp.eq.s32.totalorder %s20, 1
    %p80 = por %p78, %p79
    %p81 = scmp.ne.s32.totalorder %s72, %s73
    %p82 = scmp.eq.s32.totalorder %s20, 0
    %p83 = por %p81, %p82
    %p84 = scmp.ne.s32.totalorder %s72, %s73
    %p85 = scmp.eq.s32.totalorder %s21, 1
    %p86 = por %p84, %p85
    %p88 = scmp.ne.s32.totalorder %s73, %s87
    %p89 = scmp.eq.s32.totalorder %s21, 0
    %p90 = por %p88, %p89
    %s92 = sadd.s32 %s91, 1
    %p95 = scmp.eq.s32.totalorder %s15, 1
    %p96 = scmp.ne.s32.totalorder %s91, %s93
    %p97 = scmp.eq.s32.totalorder %s15, 0
    %p98 = por %p96, %p97
    %p99 = scmp.ne.s32.totalorder %s91, %s93
    %p100 = scmp.eq.s32.totalorder %s20, 1
    %p101 = por %p99, %p100
    %p102 = scmp.ne.s32.totalorder %s93, %s94
    %p103 = scmp.eq.s32.totalorder %s20, 0
    %p104 = por %p102, %p103
    %p105 = scmp.ne.s32.totalorder %s93, %s94
    %p106 = scmp.eq.s32.totalorder %s21, 1
    %p107 = por %p105, %p106
    %p109 = scmp.ne.s32.totalorder %s94, %s108
    %p110 = scmp.eq.s32.totalorder %s21, 0
    %p111 = por %p109, %p110
    %s113 = sadd.s32 %s112, 1
    %p116 = scmp.eq.s32.totalorder %s15, 1
    %p117 = scmp.ne.s32.totalorder %s112, %s114
    %p118 = scmp.eq.s32.totalorder %s15, 0
    %p119 = por %p117, %p118
    %p120 = scmp.ne.s32.totalorder %s112, %s114
    %p121 = scmp.eq.s32.totalorder %s20, 1
    %p122 = por %p120, %p121
    %p123 = scmp.ne.s32.totalorder %s114, %s115
    %p124 = scmp.eq.s32.totalorder %s20, 0
    %p125 = por %p123, %p124
    %p126 = scmp.ne.s32.totalorder %s114, %s115
    %p127 = scmp.eq.s32.totalorder %s21, 1
    %p128 = por %p126, %p127
    %p130 = scmp.ne.s32.totalorder %s115, %s129
    %p131 = scmp.eq.s32.totalorder %s21, 0
    %p132 = por %p130, %p131
    %s134 = sadd.s32 %s133, 1
    %p137 = scmp.eq.s32.totalorder %s15, 1
    %p138 = scmp.ne.s32.totalorder %s133, %s135
    %p139 = scmp.eq.s32.totalorder %s15, 0
    %p140 = por %p138, %p139
    %p141 = scmp.ne.s32.totalorder %s133, %s135
    %p142 = scmp.eq.s32.totalorder %s20, 1
    %p143 = por %p141, %p142
    %p144 = scmp.ne.s32.totalorder %s135, %s136
    %p145 = scmp.eq.s32.totalorder %s20, 0
    %p146 = por %p144, %p145
    %p147 = scmp.ne.s32.totalorder %s135, %s136
    %p148 = scmp.eq.s32.totalorder %s21, 1
    %p149 = por %p147, %p148
    %p151 = scmp.ne.s32.totalorder %s136, %s150
    %p152 = scmp.eq.s32.totalorder %s21, 0
    %p153 = por %p151, %p152
    %s155 = sadd.s32 %s154, 1
    %p158 = scmp.eq.s32.totalorder %s15, 1
    %p159 = scmp.ne.s32.totalorder %s154, %s156
    %p160 = scmp.eq.s32.totalorder %s15, 0
    %p161 = por %p159, %p160
    %p162 = scmp.ne.s32.totalorder %s154, %s156
    %p163 = scmp.eq.s32.totalorder %s20, 1
    %p164 = por %p162, %p163
    %p165 = scmp.ne.s32.totalorder %s156, %s157
    %p166 = scmp.eq.s32.totalorder %s20, 0
    %p167 = por %p165, %p166
    %p168 = scmp.ne.s32.totalorder %s156, %s157
    %p169 = scmp.eq.s32.totalorder %s21, 1
    %p170 = por %p168, %p169
    %p172 = scmp.ne.s32.totalorder %s157, %s171
    %p173 = scmp.eq.s32.totalorder %s21, 0
    %p174 = por %p172, %p173
    %s176 = sadd.s32 %s175, 1
    %p179 = scmp.eq.s32.totalorder %s15, 1
    %p180 = scmp.ne.s32.totalorder %s175, %s177
    %p181 = scmp.eq.s32.totalorder %s15, 0
    %p182 = por %p180, %p181
    %p183 = scmp.ne.s32.totalorder %s175, %s177
    %p184 = scmp.eq.s32.totalorder %s20, 1
    %p185 = por %p183, %p184
    %p186 = scmp.ne.s32.totalorder %s177, %s178
    %p187 = scmp.eq.s32.totalorder %s20, 0
    %p188 = por %p186, %p187
    %p189 = scmp.ne.s32.totalorder %s177, %s178
    %p190 = scmp.eq.s32.totalorder %s21, 1
    %p191 = por %p189, %p190
    %p193 = scmp.ne.s32.totalorder %s178, %s192
    %p194 = scmp.eq.s32.totalorder %s21, 0
    %p195 = por %p193, %p194
    %s197 = sadd.s32 %s196, 1
    %p200 = scmp.eq.s32.totalorder %s15, 1
    %p201 = scmp.ne.s32.totalorder %s196, %s198
    %p202 = scmp.eq.s32.totalorder %s15, 0
    %p203 = por %p201, %p202
    %p204 = scmp.ne.s32.totalorder %s196, %s198
    %p205 = scmp.eq.s32.totalorder %s20, 1
    %p206 = por %p204, %p205
    %p207 = scmp.ne.s32.totalorder %s198, %s199
    %p208 = scmp.eq.s32.totalorder %s20, 0
    %p209 = por %p207, %p208
    %p210 = scmp.ne.s32.totalorder %s198, %s199
    %p211 = scmp.eq.s32.totalorder %s21, 1
    %p212 = por %p210, %p211
    %p214 = scmp.ne.s32.totalorder %s199, %s213
    %p215 = scmp.eq.s32.totalorder %s21, 0
    %p216 = por %p214, %p215
    %s217 = ssub.s32 %s15, %s22
    %p218 = scmp.eq.s32.totalorder %s217, 0
    %s220 = sadd.s32 %s219, 1
    %s221 = scalar_select %p218, %s219, %s220
    %p224 = pneg %p218
    %p225 = scmp.eq.s32.totalorder %s15, 1
    %p226 = por %p224, %p225
    %p227 = scmp.ne.s32.totalorder %s219, %s222
    %p228 = scmp.eq.s32.totalorder %s15, 0
    %p229 = por %p227, %p228
    %p230 = scmp.ne.s32.totalorder %s219, %s222
    %p231 = scmp.eq.s32.totalorder %s20, 1
    %p232 = por %p230, %p231
    %p233 = scmp.ne.s32.totalorder %s222, %s223
    %p234 = scmp.eq.s32.totalorder %s20, 0
    %p235 = por %p233, %p234
    %p236 = scmp.ne.s32.totalorder %s222, %s223
    %p237 = scmp.eq.s32.totalorder %s21, 1
    %p238 = por %p236, %p237
    %p240 = scmp.ne.s32.totalorder %s223, %s239
    %p241 = scmp.eq.s32.totalorder %s21, 0
    %p242 = por %p240, %p241
    %p243 = scmp.le.s32.totalorder 1, %s15
    %p244 = scmp.lt.s32.totalorder %s15, 3
    %p245 = pnand %p243, %p244
    %p246 = pneg %p245
    // Predicated region
    $region9: #{fused_forward.1} parent=5 // pred_check
      _
    $region10: #{fused_forward.1} parent=5 // pred_check_branch
      %248 = sbr.rel (%p245) target = $region12
    $region11: #{fused_forward.1} parent=5 // pred_region
      %s249 = ssub.s32 %s15, 1
      // Predicated region
      $region13: #{fused_forward.1} parent=11 // pred_check
        %p250 = pneg %p62
      $region14: #{fused_forward.1} parent=11 // pred_check_branch
        %252 = sbr.rel (%p250) target = $region16
      $region15: #{fused_forward.1} parent=11 // pred_region
        _
      $region16: #{fused_forward.1} parent=11 // pred_fallthru
        _
      // Predicated region
      $region17: #{fused_forward.1} parent=11 // pred_check
        %p253 = pneg %p83
      $region18: #{fused_forward.1} parent=11 // pred_check_branch
        %255 = sbr.rel (%p253) target = $region20
      $region19: #{fused_forward.1} parent=11 // pred_region
        _
      $region20: #{fused_forward.1} parent=11 // pred_fallthru
        _
      // Predicated region
      $region21: #{fused_forward.1} parent=11 // pred_check
        %p256 = pneg %p104
      $region22: #{fused_forward.1} parent=11 // pred_check_branch
        %258 = sbr.rel (%p256) target = $region24
      $region23: #{fused_forward.1} parent=11 // pred_region
        _
      $region24: #{fused_forward.1} parent=11 // pred_fallthru
        _
      // Predicated region
      $region25: #{fused_forward.1} parent=11 // pred_check
        %p259 = pneg %p125
      $region26: #{fused_forward.1} parent=11 // pred_check_branch
        %261 = sbr.rel (%p259) target = $region28
      $region27: #{fused_forward.1} parent=11 // pred_region
        _
      $region28: #{fused_forward.1} parent=11 // pred_fallthru
        _
      // Predicated region
      $region29: #{fused_forward.1} parent=11 // pred_check
        %p262 = pneg %p146
      $region30: #{fused_forward.1} parent=11 // pred_check_branch
        %264 = sbr.rel (%p262) target = $region32
      $region31: #{fused_forward.1} parent=11 // pred_region
        _
      $region32: #{fused_forward.1} parent=11 // pred_fallthru
        _
      // Predicated region
      $region33: #{fused_forward.1} parent=11 // pred_check
        %p265 = pneg %p167
      $region34: #{fused_forward.1} parent=11 // pred_check_branch
        %267 = sbr.rel (%p265) target = $region36
      $region35: #{fused_forward.1} parent=11 // pred_region
        _
      $region36: #{fused_forward.1} parent=11 // pred_fallthru
        _
      // Predicated region
      $region37: #{fused_forward.1} parent=11 // pred_check
        %p268 = pneg %p188
      $region38: #{fused_forward.1} parent=11 // pred_check_branch
        %270 = sbr.rel (%p268) target = $region40
      $region39: #{fused_forward.1} parent=11 // pred_region
        _
      $region40: #{fused_forward.1} parent=11 // pred_fallthru
        _
      // Predicated region
      $region41: #{fused_forward.1} parent=11 // pred_check
        %p271 = pneg %p209
      $region42: #{fused_forward.1} parent=11 // pred_check_branch
        %273 = sbr.rel (%p271) target = $region44
      $region43: #{fused_forward.1} parent=11 // pred_region
        _
      $region44: #{fused_forward.1} parent=11 // pred_fallthru
        _
    $region12: #{fused_forward.1} parent=5 // pred_fallthru
      _
    %p274 = scmp.lt.s32.totalorder %s15, 2
    // Predicated region
    $region45: #{fused_forward.1} parent=5 // pred_check
      %p275 = pneg %p274
    $region46: #{fused_forward.1} parent=5 // pred_check_branch
      %277 = sbr.rel (%p275) target = $region48
    $region47: #{fused_forward.1} parent=5 // pred_region
      // Predicated region
      $region49: #{fused_forward.1} parent=47 // pred_check
        %p278 = pneg %p35
      $region50: #{fused_forward.1} parent=47 // pred_check_branch
        %280 = sbr.rel (%p278) target = $region52
      $region51: #{fused_forward.1} parent=47 // pred_region
        %p281 = scmp.lt.s32.totalorder %s15, 1
        %s282 = scalar_select %p281, %s15, 1
        %s283 = smul.addr %s282, 8
        %s284 = smul.addr %s283, 4
        %s285 = scalar_lea.vmem %s0, %s284
      $region52: #{fused_forward.1} parent=47 // pred_fallthru
        _
    $region48: #{fused_forward.1} parent=5 // pred_fallthru
      _
    %p286 = scmp.le.s32.totalorder 1, %s15
    %p287 = scmp.lt.s32.totalorder %s15, 3
    %p288 = pnand %p286, %p287
    %p289 = pneg %p288
    // Predicated region
    $region53: #{fused_forward.1} parent=5 // pred_check
      _
    $region54: #{fused_forward.1} parent=5 // pred_check_branch
      %291 = sbr.rel (%p288) target = $region56
    $region55: #{fused_forward.1} parent=5 // pred_region
      %s292 = ssub.s32 %s15, 1
      %p293 = scmp.lt.s32.totalorder %s20, 1
      %s294 = scalar_select %p293, %s20, 1
      %s295 = smul.addr %s294, 8
      %s296 = smul.addr %s295, 4
      %s297 = scalar_lea.vmem %s0, %s296
      %p298 = pneg %p41
      %p299 = pneg %p38
      %p300 = pneg %p62
      %p301 = pneg %p59
      %p302 = pneg %p83
      %p303 = pneg %p80
      %p304 = pneg %p104
      %p305 = pneg %p101
      %p306 = pneg %p125
      %p307 = pneg %p122
      %p308 = pneg %p146
      %p309 = pneg %p143
      %p310 = pneg %p167
      %p311 = pneg %p164
      %p312 = pneg %p188
      %p313 = pneg %p185
      %p314 = pneg %p209
      %p315 = pneg %p206
      %p316 = pneg %p235
      %p317 = pneg %p232
      %p318 = scmp.lt.s32.totalorder %s20, 1
      %s319 = scalar_select %p318, %s20, 1
      %s320 = scalar_lea.vmem %s9, %s319
      %p321 = scmp.lt.s32.totalorder %s20, 1
      %s322 = scalar_select %p321, %s20, 1
      %s323 = smul.addr %s322, 8
      %s324 = smul.addr %s323, 4
      %s325 = scalar_lea.vmem %s0, %s324
      %p326 = scmp.lt.s32.totalorder %s20, 1
      %s327 = scalar_select %p326, %s20, 1
      %s328 = scalar_lea.vmem %s9, %s327
      %v330 = vld [vmem:[%s325] sm:$0xf]
      %v331 = vld [vmem:[%s325 + $0x4] sm:$0xf]
      %v332 = vld [vmem:[%s325 + $0x8] sm:$0xf]
      %v333 = vld [vmem:[%s325 + $0xc] sm:$0xf]
      %v334 = vld [vmem:[%s325 + $0x10] sm:$0xf]
      %v335 = vld [vmem:[%s325 + $0x14] sm:$0xf]
      %v336 = vld [vmem:[%s325 + $0x18] sm:$0xf]
      %v337 = vld [vmem:[%s325 + $0x1c] sm:$0xf]
      %v338 = vld [vmem:[%s1] sm:$0xf]
      %v339 = vld [vmem:[%s1 + $0x4] sm:$0xf]
      %v340 = vld [vmem:[%s1 + $0x8] sm:$0xf]
      %v341 = vld [vmem:[%s1 + $0xc] sm:$0xf]
      %v350 = vunpack.c.l.b16 %v330
      %v351 = vunpack.c.l.b16 %v331
      %v352 = vunpack.c.l.b16 %v332
      %v353 = vunpack.c.l.b16 %v333
      %v354 = vunpack.c.l.b16 %v334
      %v355 = vunpack.c.l.b16 %v335
      %v356 = vunpack.c.l.b16 %v336
      %v357 = vunpack.c.l.b16 %v337
      %v358 = vpack.c.b16 %v351, %v350
      %v359 = vpack.c.b16 %v353, %v352
      %v360 = vpack.c.b16 %v355, %v354
      %v361 = vpack.c.b16 %v357, %v356
      %v366 = vunpack.c.l.b16 %v338
      %v367 = vunpack.c.l.b16 %v339
      %v368 = vunpack.c.l.b16 %v340
      %v369 = vunpack.c.l.b16 %v341
      %v370 = vpack.c.b16 %v367, %v366
      %v371 = vpack.c.b16 %v369, %v368
      %vm374 = vcmask 261120
      %v376 = vsel %vm374, %v358, 0
      %v379 = vsel %vm374, %v359, 0
      %v382 = vsel %vm374, %v360, 0
      %v385 = vsel %vm374, %v361, 0
      %387 = vmatprep.subr.bf16.mxu0 0
      %388 = vmatpush1.bf16.msra.mxu0 0
      %389 = vmatprep.subr.bf16.mxu0 0
      %390 = vmatpush1.bf16.msra.mxu0 0
      %391 = vmatprep.subr.bf16.mxu0 0
      %392 = vmatpush1.bf16.msra.mxu0 0
      %393 = vmatprep.subr.bf16.mxu0 0
      %394 = vmatpush1.bf16.msra.mxu0 0
      %395 = vmatprep.subr.bf16.mxu0 0
      %396 = vmatpush1.bf16.msra.mxu0 0
      %397 = vmatprep.subr.bf16.mxu0 0
      %398 = vmatpush1.bf16.msra.mxu0 0
      %399 = vmatprep.subr.bf16.mxu0 0
      %400 = vmatpush1.bf16.msra.mxu0 %v371
      %401 = vmatprep.subr.bf16.mxu0 0
      %402 = vmatpush1.bf16.msra.mxu0 %v370
      %403 = vmatprep.subr.bf16.mxu0 0
      %404 = vmatpush2.bf16.msra.mxu0 0
      %405 = vmatprep.subr.bf16.mxu0 0
      %406 = vmatpush2.bf16.msra.mxu0 0
      %407 = vmatprep.subr.bf16.mxu0 0
      %408 = vmatpush2.bf16.msra.mxu0 0
      %409 = vmatprep.subr.bf16.mxu0 0
      %410 = vmatpush2.bf16.msra.mxu0 0
      %411 = vmatprep.subr.bf16.mxu0 0
      %412 = vmatpush2.bf16.msra.mxu0 0
      %413 = vmatprep.subr.bf16.mxu0 0
      %414 = vmatpush2.bf16.msra.mxu0 0
      %415 = vmatprep.subr.bf16.mxu0 0
      %416 = vmatpush2.bf16.msra.mxu0 0
      %417 = vmatprep.subr.bf16.mxu0 0
      %418 = vmatpush2.bf16.msra.mxu0 0
      %419 = vmatprep.mubr.bf16.mxu0 0
      %420 = vmatmul.mubr.bf16.gmra.mxu0 %v376
      %v421 = vpop.f32.mrf.mxu0
      %v422 = vadd.f32 0.0, %v421
      %v423 = vpop.f32.mrf.mxu0
      %v424 = vpop.f32.mrf.mxu0
      %v425 = vadd.f32 0.0, %v424
      %v426 = vpop.f32.mrf.mxu0
      %427 = vmatprep.mubr.bf16.mxu0 0
      %428 = vmatmul.mubr.bf16.gmra.mxu0 %v379
      %v429 = vpop.f32.mrf.mxu0
      %v430 = vadd.f32 0.0, %v429
      %v431 = vpop.f32.mrf.mxu0
      %v432 = vpop.f32.mrf.mxu0
      %v433 = vadd.f32 0.0, %v432
      %v434 = vpop.f32.mrf.mxu0
      %435 = vmatprep.mubr.bf16.mxu0 0
      %436 = vmatmul.mubr.bf16.gmra.mxu0 %v382
      %v437 = vpop.f32.mrf.mxu0
      %v438 = vadd.f32 0.0, %v437
      %v439 = vpop.f32.mrf.mxu0
      %v440 = vpop.f32.mrf.mxu0
      %v441 = vadd.f32 0.0, %v440
      %v442 = vpop.f32.mrf.mxu0
      %443 = vmatprep.mubr.bf16.mxu0 0
      %444 = vmatmul.mubr.bf16.gmra.mxu0 %v385
      %v445 = vpop.f32.mrf.mxu0
      %v446 = vadd.f32 0.0, %v445
      %v447 = vpop.f32.mrf.mxu0
      %v448 = vpop.f32.mrf.mxu0
      %v449 = vadd.f32 0.0, %v448
      %v450 = vpop.f32.mrf.mxu0
      %451 = vdwg.mxu0
      %v452 = vmul.f32 %v422, 0.2
      %v453 = vmul.f32 %v425, 0.2
      %v454 = vmul.f32 %v430, 0.2
      %v455 = vmul.f32 %v433, 0.2
      %v456 = vmul.f32 %v438, 0.2
      %v457 = vmul.f32 %v441, 0.2
      %v458 = vmul.f32 %v446, 0.2
      %v459 = vmul.f32 %v449, 0.2
      %v460 = vmax.f32 %v422, %v452
      %v461 = vmax.f32 %v425, %v453
      %v462 = vmax.f32 %v430, %v454
      %v463 = vmax.f32 %v433, %v455
      %v464 = vmax.f32 %v438, %v456
      %v465 = vmax.f32 %v441, %v457
      %v466 = vmax.f32 %v446, %v458
      %v467 = vmax.f32 %v449, %v459
      %v468 = vpack.c.bf16 %v461, %v460
      %v469 = vpack.c.bf16 %v463, %v462
      %v470 = vpack.c.bf16 %v465, %v464
      %v471 = vpack.c.bf16 %v467, %v466
      %v472 = vld [vmem:[%s2] sm:$0xf]
      %v473 = vld [vmem:[%s2 + $0x4] sm:$0xf]
      %v474 = vld [vmem:[%s2 + $0x8] sm:$0xf]
      %v475 = vld [vmem:[%s2 + $0xc] sm:$0xf]
      %v476 = vld [vmem:[%s2 + $0x10] sm:$0xf]
      %v477 = vld [vmem:[%s2 + $0x14] sm:$0xf]
      %v478 = vld [vmem:[%s2 + $0x18] sm:$0xf]
      %v479 = vld [vmem:[%s2 + $0x1c] sm:$0xf]
      %v480 = vld [vmem:[%s2 + $0x20] sm:$0xf]
      %v481 = vld [vmem:[%s2 + $0x24] sm:$0xf]
      %v482 = vld [vmem:[%s2 + $0x28] sm:$0xf]
      %v483 = vld [vmem:[%s2 + $0x2c] sm:$0xf]
      %v484 = vld [vmem:[%s2 + $0x30] sm:$0xf]
      %v485 = vld [vmem:[%s2 + $0x34] sm:$0xf]
      %v486 = vld [vmem:[%s2 + $0x38] sm:$0xf]
      %v487 = vld [vmem:[%s2 + $0x3c] sm:$0xf]
      %v488 = vld [vmem:[%s2 + $0x40] sm:$0xf]
      %v489 = vld [vmem:[%s2 + $0x44] sm:$0xf]
      %v508 = vunpack.c.l.b16 %v472
      %v509 = vunpack.c.l.b16 %v473
      %v510 = vunpack.c.l.b16 %v474
      %v511 = vunpack.c.l.b16 %v475
      %v512 = vunpack.c.l.b16 %v476
      %v513 = vunpack.c.l.b16 %v477
      %v514 = vunpack.c.l.b16 %v478
      %v515 = vunpack.c.l.b16 %v479
      %v516 = vunpack.c.l.b16 %v480
      %v517 = vunpack.c.l.b16 %v481
      %v518 = vunpack.c.l.b16 %v482
      %v519 = vunpack.c.l.b16 %v483
      %v520 = vunpack.c.l.b16 %v484
      %v521 = vunpack.c.l.b16 %v485
      %v522 = vunpack.c.l.b16 %v486
      %v523 = vunpack.c.l.b16 %v487
      %v524 = vunpack.c.l.b16 %v488
      %v525 = vunpack.c.l.b16 %v489
      %v526 = vpack.c.b16 %v509, %v508
      %v527 = vpack.c.b16 %v511, %v510
      %v528 = vpack.c.b16 %v513, %v512
      %v529 = vpack.c.b16 %v515, %v514
      %v530 = vpack.c.b16 %v517, %v516
      %v531 = vpack.c.b16 %v519, %v518
      %v532 = vpack.c.b16 %v521, %v520
      %v533 = vpack.c.b16 %v523, %v522
      %v534 = vpack.c.b16 %v525, %v524
      %vm535 = vcmask 523264
      %v537 = vsel %vm535, %v526, 0
      %v540 = vsel %vm535, %v527, 0
      %v543 = vsel %vm535, %v528, 0
      %v546 = vsel %vm535, %v529, 0
      %v549 = vsel %vm535, %v530, 0
      %v552 = vsel %vm535, %v531, 0
      %v555 = vsel %vm535, %v532, 0
      %v558 = vsel %vm535, %v533, 0
      %v561 = vsel %vm535, %v534, 0
      %563 = vmatprep.subr.bf16.mxu0 0
      %564 = vmatpush1.bf16.msra.mxu0 0
      %565 = vmatprep.subr.bf16.mxu0 0
      %566 = vmatpush1.bf16.msra.mxu0 0
      %567 = vmatprep.subr.bf16.mxu0 0
      %568 = vmatpush1.bf16.msra.mxu0 0
      %569 = vmatprep.subr.bf16.mxu0 0
      %570 = vmatpush1.bf16.msra.mxu0 0
      %571 = vmatprep.subr.bf16.mxu0 0
      %572 = vmatpush1.bf16.msra.mxu0 %v471
      %573 = vmatprep.subr.bf16.mxu0 0
      %574 = vmatpush1.bf16.msra.mxu0 %v470
      %575 = vmatprep.subr.bf16.mxu0 0
      %576 = vmatpush1.bf16.msra.mxu0 %v469
      %577 = vmatprep.subr.bf16.mxu0 0
      %578 = vmatpush1.bf16.msra.mxu0 %v468
      %579 = vmatprep.subr.bf16.mxu0 0
      %580 = vmatpush2.bf16.msra.mxu0 0
      %581 = vmatprep.subr.bf16.mxu0 0
      %582 = vmatpush2.bf16.msra.mxu0 0
      %583 = vmatprep.subr.bf16.mxu0 0
      %584 = vmatpush2.bf16.msra.mxu0 0
      %585 = vmatprep.subr.bf16.mxu0 0
      %586 = vmatpush2.bf16.msra.mxu0 0
      %587 = vmatprep.subr.bf16.mxu0 0
      %588 = vmatpush2.bf16.msra.mxu0 0
      %589 = vmatprep.subr.bf16.mxu0 0
      %590 = vmatpush2.bf16.msra.mxu0 0
      %591 = vmatprep.subr.bf16.mxu0 0
      %592 = vmatpush2.bf16.msra.mxu0 0
      %593 = vmatprep.subr.bf16.mxu0 0
      %594 = vmatpush2.bf16.msra.mxu0 0
      %595 = vmatprep.mubr.bf16.mxu0 0
      %596 = vmatmul.mubr.bf16.gmra.mxu0 %v537
      %v597 = vpop.f32.mrf.mxu0
      %v598 = vadd.f32 0.0, %v597
      %v599 = vpop.f32.mrf.mxu0
      %v600 = vpop.f32.mrf.mxu0
      %v601 = vadd.f32 0.0, %v600
      %v602 = vpop.f32.mrf.mxu0
      %603 = vmatprep.mubr.bf16.mxu0 0
      %604 = vmatmul.mubr.bf16.gmra.mxu0 %v540
      %v605 = vpop.f32.mrf.mxu0
      %v606 = vadd.f32 0.0, %v605
      %v607 = vpop.f32.mrf.mxu0
      %v608 = vpop.f32.mrf.mxu0
      %v609 = vadd.f32 0.0, %v608
      %v610 = vpop.f32.mrf.mxu0
      %611 = vmatprep.mubr.bf16.mxu0 0
      %612 = vmatmul.mubr.bf16.gmra.mxu0 %v543
      %v613 = vpop.f32.mrf.mxu0
      %v614 = vadd.f32 0.0, %v613
      %v615 = vpop.f32.mrf.mxu0
      %v616 = vpop.f32.mrf.mxu0
      %v617 = vadd.f32 0.0, %v616
      %v618 = vpop.f32.mrf.mxu0
      %619 = vmatprep.mubr.bf16.mxu0 0
      %620 = vmatmul.mubr.bf16.gmra.mxu0 %v546
      %v621 = vpop.f32.mrf.mxu0
      %v622 = vadd.f32 0.0, %v621
      %v623 = vpop.f32.mrf.mxu0
      %v624 = vpop.f32.mrf.mxu0
      %v625 = vadd.f32 0.0, %v624
      %v626 = vpop.f32.mrf.mxu0
      %627 = vmatprep.mubr.bf16.mxu0 0
      %628 = vmatmul.mubr.bf16.gmra.mxu0 %v549
      %v629 = vpop.f32.mrf.mxu0
      %v630 = vadd.f32 0.0, %v629
      %v631 = vpop.f32.mrf.mxu0
      %v632 = vpop.f32.mrf.mxu0
      %v633 = vadd.f32 0.0, %v632
      %v634 = vpop.f32.mrf.mxu0
      %635 = vmatprep.mubr.bf16.mxu0 0
      %636 = vmatmul.mubr.bf16.gmra.mxu0 %v552
      %v637 = vpop.f32.mrf.mxu0
      %v638 = vadd.f32 0.0, %v637
      %v639 = vpop.f32.mrf.mxu0
      %v640 = vpop.f32.mrf.mxu0
      %v641 = vadd.f32 0.0, %v640
      %v642 = vpop.f32.mrf.mxu0
      %643 = vmatprep.mubr.bf16.mxu0 0
      %644 = vmatmul.mubr.bf16.gmra.mxu0 %v555
      %v645 = vpop.f32.mrf.mxu0
      %v646 = vadd.f32 0.0, %v645
      %v647 = vpop.f32.mrf.mxu0
      %v648 = vpop.f32.mrf.mxu0
      %v649 = vadd.f32 0.0, %v648
      %v650 = vpop.f32.mrf.mxu0
      %651 = vmatprep.mubr.bf16.mxu0 0
      %652 = vmatmul.mubr.bf16.gmra.mxu0 %v558
      %v653 = vpop.f32.mrf.mxu0
      %v654 = vadd.f32 0.0, %v653
      %v655 = vpop.f32.mrf.mxu0
      %v656 = vpop.f32.mrf.mxu0
      %v657 = vadd.f32 0.0, %v656
      %v658 = vpop.f32.mrf.mxu0
      %659 = vmatprep.mubr.bf16.mxu0 0
      %660 = vmatmul.mubr.bf16.gmra.mxu0 %v561
      %v661 = vpop.f32.mrf.mxu0
      %v662 = vadd.f32 0.0, %v661
      %v663 = vpop.f32.mrf.mxu0
      %v664 = vpop.f32.mrf.mxu0
      %v665 = vadd.f32 0.0, %v664
      %v666 = vpop.f32.mrf.mxu0
      %667 = vdwg.mxu0
      %668 = vst.msk [vmem:[#allocation2] sm:$0xff] %vm374, %v598
      %669 = vst.msk [vmem:[#allocation2 + $0x18] sm:$0xff] %vm374, %v601
      %672 = vrot.lane.b32.xlu0 %v606, 32
      %v673 = vpop.permute.xlu0 %672
      %674 = vrot.lane.b32.xlu0 %v609, 32
      %v675 = vpop.permute.xlu0 %674
      %vm678 = vcmask 523520
      %679 = vst.msk [vmem:[#allocation2] sm:$0xff] %vm678, %v673
      %680 = vst.msk [vmem:[#allocation2 + $0x18] sm:$0xff] %vm678, %v675
      %683 = vrot.lane.b32.xlu0 %v614, 64
      %v684 = vpop.permute.xlu0 %683
      %685 = vrot.lane.b32.xlu0 %v617, 64
      %v686 = vpop.permute.xlu0 %685
      %vm689 = vcmask 785920
      %690 = vst.msk [vmem:[#allocation2] sm:$0xff] %vm689, %v684
      %691 = vst.msk [vmem:[#allocation2 + $0x18] sm:$0xff] %vm689, %v686
      %694 = vrot.lane.b32.xlu0 %v622, 96
      %v695 = vpop.permute.xlu0 %694
      %696 = vrot.lane.b32.xlu0 %v625, 96
      %v697 = vpop.permute.xlu0 %696
      %vm700 = vcmask 1048320
      %701 = vst.msk [vmem:[#allocation2] sm:$0xff] %vm700, %v695
      %702 = vst.msk [vmem:[#allocation2 + $0x18] sm:$0xff] %vm700, %v697
      %703 = vst.msk [vmem:[#allocation2 + $0x8] sm:$0xff] %vm374, %v630
      %704 = vst.msk [vmem:[#allocation2 + $0x20] sm:$0xff] %vm374, %v633
      %707 = vrot.lane.b32.xlu0 %v638, 32
      %v708 = vpop.permute.xlu0 %707
      %709 = vrot.lane.b32.xlu0 %v641, 32
      %v710 = vpop.permute.xlu0 %709
      %713 = vst.msk [vmem:[#allocation2 + $0x8] sm:$0xff] %vm678, %v708
      %714 = vst.msk [vmem:[#allocation2 + $0x20] sm:$0xff] %vm678, %v710
      %717 = vrot.lane.b32.xlu0 %v646, 64
      %v718 = vpop.permute.xlu0 %717
      %719 = vrot.lane.b32.xlu0 %v649, 64
      %v720 = vpop.permute.xlu0 %719
      %723 = vst.msk [vmem:[#allocation2 + $0x8] sm:$0xff] %vm689, %v718
      %724 = vst.msk [vmem:[#allocation2 + $0x20] sm:$0xff] %vm689, %v720
      %727 = vrot.lane.b32.xlu0 %v654, 96
      %v728 = vpop.permute.xlu0 %727
      %729 = vrot.lane.b32.xlu0 %v657, 96
      %v730 = vpop.permute.xlu0 %729
      %733 = vst.msk [vmem:[#allocation2 + $0x8] sm:$0xff] %vm700, %v728
      %734 = vst.msk [vmem:[#allocation2 + $0x20] sm:$0xff] %vm700, %v730
      %735 = vst.msk [vmem:[#allocation2 + $0x10] sm:$0xff] %vm374, %v662
      %736 = vst.msk [vmem:[#allocation2 + $0x28] sm:$0xff] %vm374, %v665
      %v737 = vld [vmem:[#allocation2] sm:$0xff]
      %v738 = vld [vmem:[#allocation2 + $0x8] sm:$0xff]
      %v739 = vld [vmem:[#allocation2 + $0x10] sm:$0xff]
      %v740 = vld [vmem:[#allocation2 + $0x18] sm:$0xff]
      %v741 = vld [vmem:[#allocation2 + $0x20] sm:$0xff]
      %v742 = vld [vmem:[#allocation2 + $0x28] sm:$0xff]
      %v743 = vpack.c.bf16 %v740, %v737
      %v744 = vpack.c.bf16 %v741, %v738
      %v745 = vpack.c.bf16 %v742, %v739
      %v746 = vld [vmem:[%s3] sm:$0xf]
      %v747 = vld [vmem:[%s3 + $0x4] sm:$0xf]
      %v748 = vld [vmem:[%s3 + $0x8] sm:$0xf]
      %v749 = vld [vmem:[%s3 + $0xc] sm:$0xf]
      %v750 = vld [vmem:[%s3 + $0x10] sm:$0xf]
      %v751 = vld [vmem:[%s3 + $0x14] sm:$0xf]
      %v752 = vld [vmem:[%s3 + $0x18] sm:$0xf]
      %v753 = vld [vmem:[%s3 + $0x1c] sm:$0xf]
      %v754 = vld [vmem:[%s3 + $0x20] sm:$0xf]
      %v755 = vld [vmem:[%s3 + $0x24] sm:$0xf]
      %v756 = vld [vmem:[%s3 + $0x28] sm:$0xf]
      %v757 = vld [vmem:[%s3 + $0x2c] sm:$0xf]
      %v758 = vld [vmem:[%s3 + $0x30] sm:$0xf]
      %v759 = vld [vmem:[%s3 + $0x34] sm:$0xf]
      %v760 = vld [vmem:[%s3 + $0x38] sm:$0xf]
      %v761 = vld [vmem:[%s3 + $0x3c] sm:$0xf]
      %v762 = vld [vmem:[%s3 + $0x40] sm:$0xf]
      %v763 = vld [vmem:[%s3 + $0x44] sm:$0xf]
      %v764 = vld [vmem:[%s3 + $0x48] sm:$0xf]
      %v765 = vld [vmem:[%s3 + $0x4c] sm:$0xf]
      %v766 = vld [vmem:[%s3 + $0x50] sm:$0xf]
      %v767 = vld [vmem:[%s3 + $0x54] sm:$0xf]
      %v768 = vld [vmem:[%s3 + $0x58] sm:$0xf]
      %v769 = vld [vmem:[%s3 + $0x5c] sm:$0xf]
      %v770 = vld [vmem:[%s3 + $0x60] sm:$0xf]
      %v771 = vld [vmem:[%s3 + $0x64] sm:$0xf]
      %v772 = vld [vmem:[%s3 + $0x68] sm:$0xf]
      %v773 = vld [vmem:[%s3 + $0x6c] sm:$0xf]
      %v774 = vld [vmem:[%s3 + $0x70] sm:$0xf]
      %v775 = vld [vmem:[%s3 + $0x74] sm:$0xf]
      %v776 = vld [vmem:[%s3 + $0x78] sm:$0xf]
      %v777 = vld [vmem:[%s3 + $0x7c] sm:$0xf]
      %v778 = vld [vmem:[%s3 + $0x80] sm:$0xf]
      %v779 = vld [vmem:[%s3 + $0x84] sm:$0xf]
      %v780 = vld [vmem:[%s3 + $0x88] sm:$0xf]
      %v781 = vld [vmem:[%s3 + $0x8c] sm:$0xf]
      %v818 = vunpack.c.l.b16 %v746
      %v819 = vunpack.c.l.b16 %v747
      %v820 = vunpack.c.l.b16 %v748
      %v821 = vunpack.c.l.b16 %v749
      %v822 = vunpack.c.l.b16 %v750
      %v823 = vunpack.c.l.b16 %v751
      %v824 = vunpack.c.l.b16 %v752
      %v825 = vunpack.c.l.b16 %v753
      %v826 = vunpack.c.l.b16 %v754
      %v827 = vunpack.c.l.b16 %v755
      %v828 = vunpack.c.l.b16 %v756
      %v829 = vunpack.c.l.b16 %v757
      %v830 = vunpack.c.l.b16 %v758
      %v831 = vunpack.c.l.b16 %v759
      %v832 = vunpack.c.l.b16 %v760
      %v833 = vunpack.c.l.b16 %v761
      %v834 = vunpack.c.l.b16 %v762
      %v835 = vunpack.c.l.b16 %v763
      %v836 = vunpack.c.l.b16 %v764
      %v837 = vunpack.c.l.b16 %v765
      %v838 = vunpack.c.l.b16 %v766
      %v839 = vunpack.c.l.b16 %v767
      %v840 = vunpack.c.l.b16 %v768
      %v841 = vunpack.c.l.b16 %v769
      %v842 = vunpack.c.l.b16 %v770
      %v843 = vunpack.c.l.b16 %v771
      %v844 = vunpack.c.l.b16 %v772
      %v845 = vunpack.c.l.b16 %v773
      %v846 = vunpack.c.l.b16 %v774
      %v847 = vunpack.c.l.b16 %v775
      %v848 = vunpack.c.l.b16 %v776
      %v849 = vunpack.c.l.b16 %v777
      %v850 = vunpack.c.l.b16 %v778
      %v851 = vunpack.c.l.b16 %v779
      %v852 = vunpack.c.l.b16 %v780
      %v853 = vunpack.c.l.b16 %v781
      %v854 = vpack.c.b16 %v819, %v818
      %v855 = vpack.c.b16 %v821, %v820
      %v856 = vpack.c.b16 %v823, %v822
      %v857 = vpack.c.b16 %v825, %v824
      %v858 = vpack.c.b16 %v827, %v826
      %v859 = vpack.c.b16 %v829, %v828
      %v860 = vpack.c.b16 %v831, %v830
      %v861 = vpack.c.b16 %v833, %v832
      %v862 = vpack.c.b16 %v835, %v834
      %v863 = vpack.c.b16 %v837, %v836
      %v864 = vpack.c.b16 %v839, %v838
      %v865 = vpack.c.b16 %v841, %v840
      %v866 = vpack.c.b16 %v843, %v842
      %v867 = vpack.c.b16 %v845, %v844
      %v868 = vpack.c.b16 %v847, %v846
      %v869 = vpack.c.b16 %v849, %v848
      %v870 = vpack.c.b16 %v851, %v850
      %v871 = vpack.c.b16 %v853, %v852
      %v891 = vsel %vm374, %v745, 0
      %893 = vmatprep.subr.bf16.mxu0 0
      %894 = vmatpush1.bf16.msra.mxu0 %v861
      %895 = vmatprep.subr.bf16.mxu0 0
      %896 = vmatpush1.bf16.msra.mxu0 %v860
      %897 = vmatprep.subr.bf16.mxu0 0
      %898 = vmatpush1.bf16.msra.mxu0 %v859
      %899 = vmatprep.subr.bf16.mxu0 0
      %900 = vmatpush1.bf16.msra.mxu0 %v858
      %901 = vmatprep.subr.bf16.mxu0 0
      %902 = vmatpush1.bf16.msra.mxu0 %v857
      %903 = vmatprep.subr.bf16.mxu0 0
      %904 = vmatpush1.bf16.msra.mxu0 %v856
      %905 = vmatprep.subr.bf16.mxu0 0
      %906 = vmatpush1.bf16.msra.mxu0 %v855
      %907 = vmatprep.subr.bf16.mxu0 0
      %908 = vmatpush1.bf16.msra.mxu0 %v854
      %909 = vmatprep.subr.bf16.mxu0 0
      %910 = vmatpush2.bf16.msra.mxu0 %v869
      %911 = vmatprep.subr.bf16.mxu0 0
      %912 = vmatpush2.bf16.msra.mxu0 %v868
      %913 = vmatprep.subr.bf16.mxu0 0
      %914 = vmatpush2.bf16.msra.mxu0 %v867
      %915 = vmatprep.subr.bf16.mxu0 0
      %916 = vmatpush2.bf16.msra.mxu0 %v866
      %917 = vmatprep.subr.bf16.mxu0 0
      %918 = vmatpush2.bf16.msra.mxu0 %v865
      %919 = vmatprep.subr.bf16.mxu0 0
      %920 = vmatpush2.bf16.msra.mxu0 %v864
      %921 = vmatprep.subr.bf16.mxu0 0
      %922 = vmatpush2.bf16.msra.mxu0 %v863
      %923 = vmatprep.subr.bf16.mxu0 0
      %924 = vmatpush2.bf16.msra.mxu0 %v862
      %925 = vmatprep.mubr.bf16.mxu0 %v744
      %926 = vmatmul.mubr.bf16.gmra.mxu0 %v743
      %v927 = vpop.f32.mrf.mxu0
      %v928 = vadd.f32 0.0, %v927
      %v929 = vpop.f32.mrf.mxu0
      %v930 = vpop.f32.mrf.mxu0
      %v931 = vadd.f32 0.0, %v930
      %v932 = vpop.f32.mrf.mxu0
      %933 = vdwg.mxu0
      %934 = vmatprep.subr.bf16.mxu0 0
      %935 = vmatpush1.bf16.msra.mxu0 0
      %936 = vmatprep.subr.bf16.mxu0 0
      %937 = vmatpush1.bf16.msra.mxu0 0
      %938 = vmatprep.subr.bf16.mxu0 0
      %939 = vmatpush1.bf16.msra.mxu0 0
      %940 = vmatprep.subr.bf16.mxu0 0
      %941 = vmatpush1.bf16.msra.mxu0 0
      %942 = vmatprep.subr.bf16.mxu0 0
      %943 = vmatpush1.bf16.msra.mxu0 0
      %944 = vmatprep.subr.bf16.mxu0 0
      %945 = vmatpush1.bf16.msra.mxu0 0
      %946 = vmatprep.subr.bf16.mxu0 0
      %947 = vmatpush1.bf16.msra.mxu0 %v871
      %948 = vmatprep.subr.bf16.mxu0 0
      %949 = vmatpush1.bf16.msra.mxu0 %v870
      %950 = vmatprep.subr.bf16.mxu0 0
      %951 = vmatpush2.bf16.msra.mxu0 0
      %952 = vmatprep.subr.bf16.mxu0 0
      %953 = vmatpush2.bf16.msra.mxu0 0
      %954 = vmatprep.subr.bf16.mxu0 0
      %955 = vmatpush2.bf16.msra.mxu0 0
      %956 = vmatprep.subr.bf16.mxu0 0
      %957 = vmatpush2.bf16.msra.mxu0 0
      %958 = vmatprep.subr.bf16.mxu0 0
      %959 = vmatpush2.bf16.msra.mxu0 0
      %960 = vmatprep.subr.bf16.mxu0 0
      %961 = vmatpush2.bf16.msra.mxu0 0
      %962 = vmatprep.subr.bf16.mxu0 0
      %963 = vmatpush2.bf16.msra.mxu0 0
      %964 = vmatprep.subr.bf16.mxu0 0
      %965 = vmatpush2.bf16.msra.mxu0 0
      %966 = vmatprep.mubr.bf16.mxu0 0
      %967 = vmatmul.mubr.bf16.gmra.mxu0 %v891
      %v968 = vpop.f32.mrf.mxu0
      %v969 = vadd.f32 %v928, %v968
      %v970 = vpop.f32.mrf.mxu0
      %v971 = vpop.f32.mrf.mxu0
      %v972 = vadd.f32 %v931, %v971
      %v973 = vpop.f32.mrf.mxu0
      %974 = vdwg.mxu0
      %v975 = vmul.f32 %v969, 0.2
      %v976 = vmul.f32 %v972, 0.2
      %v977 = vmax.f32 %v969, %v975
      %v978 = vmax.f32 %v972, %v976
      %v979 = vpack.c.bf16 %v978, %v977
      %v980 = vld [vmem:[%s4] sm:$0xff]
      %v981 = vld [vmem:[%s4 + $0x8] sm:$0xff]
      %v982 = vld [vmem:[%s4 + $0x10] sm:$0xff]
      %v983 = vld [vmem:[%s4 + $0x18] sm:$0xff]
      %v984 = vld [vmem:[%s4 + $0x20] sm:$0xff]
      %v985 = vld [vmem:[%s4 + $0x28] sm:$0xff]
      %v986 = vld [vmem:[%s4 + $0x30] sm:$0xff]
      %v987 = vld [vmem:[%s4 + $0x38] sm:$0xff]
      %v996 = vunpack.c.l.b16 %v980
      %v997 = vunpack.c.h.b16 %v980
      %v998 = vunpack.c.l.b16 %v981
      %v999 = vunpack.c.h.b16 %v981
      %v1000 = vunpack.c.l.b16 %v982
      %v1001 = vunpack.c.h.b16 %v982
      %v1002 = vunpack.c.l.b16 %v983
      %v1003 = vunpack.c.h.b16 %v983
      %v1004 = vunpack.c.l.b16 %v984
      %v1005 = vunpack.c.h.b16 %v984
      %v1006 = vunpack.c.l.b16 %v985
      %v1007 = vunpack.c.h.b16 %v985
      %v1008 = vunpack.c.l.b16 %v986
      %v1009 = vunpack.c.h.b16 %v986
      %v1010 = vunpack.c.l.b16 %v987
      %v1011 = vunpack.c.h.b16 %v987
      %v1012 = vpack.c.b16 %v1000, %v996
      %v1013 = vpack.c.b16 %v1001, %v997
      %v1014 = vpack.c.b16 %v1002, %v998
      %v1015 = vpack.c.b16 %v1003, %v999
      %v1016 = vpack.c.b16 %v1008, %v1004
      %v1017 = vpack.c.b16 %v1009, %v1005
      %v1018 = vpack.c.b16 %v1010, %v1006
      %v1019 = vpack.c.b16 %v1011, %v1007
      %v1029 = vsel %vm374, %v979, 0
      %1031 = vmatprep.subr.bf16.mxu0 0
      %1032 = vmatpush1.bf16.msra.mxu0 0
      %1033 = vmatprep.subr.bf16.mxu0 0
      %1034 = vmatpush1.bf16.msra.mxu0 0
      %1035 = vmatprep.subr.bf16.mxu0 0
      %1036 = vmatpush1.bf16.msra.mxu0 0
      %1037 = vmatprep.subr.bf16.mxu0 0
      %1038 = vmatpush1.bf16.msra.mxu0 0
      %1039 = vmatprep.subr.bf16.mxu0 0
      %1040 = vmatpush1.bf16.msra.mxu0 0
      %1041 = vmatprep.subr.bf16.mxu0 0
      %1042 = vmatpush1.bf16.msra.mxu0 0
      %1043 = vmatprep.subr.bf16.mxu0 %v1017
      %1044 = vmatpush1.bf16.msra.mxu0 %v1016
      %1045 = vmatprep.subr.bf16.mxu0 %v1013
      %1046 = vmatpush1.bf16.msra.mxu0 %v1012
      %1047 = vmatprep.subr.bf16.mxu0 0
      %1048 = vmatpush2.bf16.msra.mxu0 0
      %1049 = vmatprep.subr.bf16.mxu0 0
      %1050 = vmatpush2.bf16.msra.mxu0 0
      %1051 = vmatprep.subr.bf16.mxu0 0
      %1052 = vmatpush2.bf16.msra.mxu0 0
      %1053 = vmatprep.subr.bf16.mxu0 0
      %1054 = vmatpush2.bf16.msra.mxu0 0
      %1055 = vmatprep.subr.bf16.mxu0 0
      %1056 = vmatpush2.bf16.msra.mxu0 0
      %1057 = vmatprep.subr.bf16.mxu0 0
      %1058 = vmatpush2.bf16.msra.mxu0 0
      %1059 = vmatprep.subr.bf16.mxu0 0
      %1060 = vmatpush2.bf16.msra.mxu0 0
      %1061 = vmatprep.subr.bf16.mxu0 0
      %1062 = vmatpush2.bf16.msra.mxu0 0
      %1063 = vmatprep.mubr.bf16.mxu0 0
      %1064 = vmatmul.mubr.bf16.gmra.mxu0 %v1029
      %v1065 = vpop.f32.mrf.mxu0
      %v1066 = vadd.f32 0.0, %v1065
      %v1067 = vpop.f32.mrf.mxu0
      %v1068 = vadd.f32 0.0, %v1067
      %v1069 = vpop.f32.mrf.mxu0
      %v1070 = vadd.f32 0.0, %v1069
      %v1071 = vpop.f32.mrf.mxu0
      %v1072 = vadd.f32 0.0, %v1071
      %1073 = vdwg.mxu0
      %1074 = vmatprep.subr.bf16.mxu0 0
      %1075 = vmatpush1.bf16.msra.mxu0 0
      %1076 = vmatprep.subr.bf16.mxu0 0
      %1077 = vmatpush1.bf16.msra.mxu0 0
      %1078 = vmatprep.subr.bf16.mxu0 0
      %1079 = vmatpush1.bf16.msra.mxu0 0
      %1080 = vmatprep.subr.bf16.mxu0 0
      %1081 = vmatpush1.bf16.msra.mxu0 0
      %1082 = vmatprep.subr.bf16.mxu0 0
      %1083 = vmatpush1.bf16.msra.mxu0 0
      %1084 = vmatprep.subr.bf16.mxu0 0
      %1085 = vmatpush1.bf16.msra.mxu0 0
      %1086 = vmatprep.subr.bf16.mxu0 %v1019
      %1087 = vmatpush1.bf16.msra.mxu0 %v1018
      %1088 = vmatprep.subr.bf16.mxu0 %v1015
      %1089 = vmatpush1.bf16.msra.mxu0 %v1014
      %1090 = vmatprep.subr.bf16.mxu0 0
      %1091 = vmatpush2.bf16.msra.mxu0 0
      %1092 = vmatprep.subr.bf16.mxu0 0
      %1093 = vmatpush2.bf16.msra.mxu0 0
      %1094 = vmatprep.subr.bf16.mxu0 0
      %1095 = vmatpush2.bf16.msra.mxu0 0
      %1096 = vmatprep.subr.bf16.mxu0 0
      %1097 = vmatpush2.bf16.msra.mxu0 0
      %1098 = vmatprep.subr.bf16.mxu0 0
      %1099 = vmatpush2.bf16.msra.mxu0 0
      %1100 = vmatprep.subr.bf16.mxu0 0
      %1101 = vmatpush2.bf16.msra.mxu0 0
      %1102 = vmatprep.subr.bf16.mxu0 0
      %1103 = vmatpush2.bf16.msra.mxu0 0
      %1104 = vmatprep.subr.bf16.mxu0 0
      %1105 = vmatpush2.bf16.msra.mxu0 0
      %1106 = vmatprep.mubr.bf16.mxu0 0
      %1107 = vmatmul.mubr.bf16.gmra.mxu0 %v1029
      %v1108 = vpop.f32.mrf.mxu0
      %v1109 = vadd.f32 0.0, %v1108
      %v1110 = vpop.f32.mrf.mxu0
      %v1111 = vadd.f32 0.0, %v1110
      %v1112 = vpop.f32.mrf.mxu0
      %v1113 = vadd.f32 0.0, %v1112
      %v1114 = vpop.f32.mrf.mxu0
      %v1115 = vadd.f32 0.0, %v1114
      %1116 = vdwg.mxu0
      %v1117 = vld [vmem:[%s5] sm:$0xff]
      %v1118 = vld [vmem:[%s5 + $0x8] sm:$0xff]
      %v1119 = vld [vmem:[%s5 + $0x10] sm:$0xff]
      %v1120 = vld [vmem:[%s5 + $0x18] sm:$0xff]
      %v1121 = vld [vmem:[%s5 + $0x20] sm:$0xff]
      %v1122 = vld [vmem:[%s5 + $0x28] sm:$0xff]
      %v1123 = vld [vmem:[%s5 + $0x30] sm:$0xff]
      %v1124 = vld [vmem:[%s5 + $0x38] sm:$0xff]
      %v1125 = vmul.f32 %v1066, %v1117
      %v1126 = vmul.f32 %v1068, %v1118
      %v1127 = vmul.f32 %v1109, %v1119
      %v1128 = vmul.f32 %v1111, %v1120
      %v1129 = vmul.f32 %v1070, %v1121
      %v1130 = vmul.f32 %v1072, %v1122
      %v1131 = vmul.f32 %v1113, %v1123
      %v1132 = vmul.f32 %v1115, %v1124
      %v1133 = vadd.f32 %v1125, %v1129
      %v1134 = vrot.slane %v1133, 4
      %v1135 = vadd.f32 %v1133, %v1134
      %v1136 = vrot.slane %v1135, 2
      %v1137 = vadd.f32 %v1135, %v1136
      %v1138 = vrot.slane %v1137, 1
      %v1139 = vadd.f32 %v1137, %v1138
      %v1140 = vadd.f32 %v1126, %v1130
      %v1141 = vrot.slane %v1140, 4
      %v1142 = vadd.f32 %v1140, %v1141
      %v1143 = vrot.slane %v1142, 2
      %v1144 = vadd.f32 %v1142, %v1143
      %v1145 = vrot.slane %v1144, 1
      %v1146 = vadd.f32 %v1144, %v1145
      %v1147 = vadd.f32 %v1127, %v1131
      %v1148 = vrot.slane %v1147, 4
      %v1149 = vadd.f32 %v1147, %v1148
      %v1150 = vrot.slane %v1149, 2
      %v1151 = vadd.f32 %v1149, %v1150
      %v1152 = vrot.slane %v1151, 1
      %v1153 = vadd.f32 %v1151, %v1152
      %v1154 = vadd.f32 %v1128, %v1132
      %v1155 = vrot.slane %v1154, 4
      %v1156 = vadd.f32 %v1154, %v1155
      %v1157 = vrot.slane %v1156, 2
      %v1158 = vadd.f32 %v1156, %v1157
      %v1159 = vrot.slane %v1158, 1
      %v1160 = vadd.f32 %v1158, %v1159
      %v1161 = vld [vmem:[%s6] sm:$0xff]
      %v1162 = vld [vmem:[%s6 + $0x8] sm:$0xff]
      %v1163 = vld [vmem:[%s6 + $0x10] sm:$0xff]
      %v1164 = vld [vmem:[%s6 + $0x18] sm:$0xff]
      %v1165 = vld [vmem:[%s6 + $0x20] sm:$0xff]
      %v1166 = vld [vmem:[%s6 + $0x28] sm:$0xff]
      %v1167 = vld [vmem:[%s6 + $0x30] sm:$0xff]
      %v1168 = vld [vmem:[%s6 + $0x38] sm:$0xff]
      %v1169 = vld [vmem:[%s6 + $0x40] sm:$0xff]
      %v1170 = vld [vmem:[%s6 + $0x48] sm:$0xff]
      %v1171 = vld [vmem:[%s6 + $0x50] sm:$0xff]
      %v1172 = vld [vmem:[%s6 + $0x58] sm:$0xff]
      %v1173 = vld [vmem:[%s6 + $0x60] sm:$0xff]
      %v1174 = vld [vmem:[%s6 + $0x68] sm:$0xff]
      %v1175 = vld [vmem:[%s6 + $0x70] sm:$0xff]
      %v1176 = vld [vmem:[%s6 + $0x78] sm:$0xff]
      %v1177 = vld [vmem:[%s6 + $0x80] sm:$0xff]
      %v1178 = vld [vmem:[%s6 + $0x88] sm:$0xff]
      %v1179 = vld [vmem:[%s6 + $0x90] sm:$0xff]
      %v1180 = vld [vmem:[%s6 + $0x98] sm:$0xff]
      %v1181 = vld [vmem:[%s6 + $0xa0] sm:$0xff]
      %v1182 = vld [vmem:[%s6 + $0xa8] sm:$0xff]
      %v1183 = vld [vmem:[%s6 + $0xb0] sm:$0xff]
      %v1184 = vld [vmem:[%s6 + $0xb8] sm:$0xff]
      %v1185 = vld [vmem:[%s6 + $0xc0] sm:$0xff]
      %v1186 = vld [vmem:[%s6 + $0xc8] sm:$0xff]
      %v1187 = vld [vmem:[%s6 + $0xd0] sm:$0xff]
      %v1188 = vld [vmem:[%s6 + $0xd8] sm:$0xff]
      %v1189 = vld [vmem:[%s6 + $0xe0] sm:$0xff]
      %v1190 = vld [vmem:[%s6 + $0xe8] sm:$0xff]
      %v1191 = vld [vmem:[%s6 + $0xf0] sm:$0xff]
      %v1192 = vld [vmem:[%s6 + $0xf8] sm:$0xff]
      %v1193 = vld [vmem:[%s6 + $0x100] sm:$0xff]
      %v1194 = vld [vmem:[%s6 + $0x108] sm:$0xff]
      %v1195 = vld [vmem:[%s6 + $0x110] sm:$0xff]
      %v1196 = vld [vmem:[%s6 + $0x118] sm:$0xff]
      %v1197 = vld [vmem:[%s6 + $0x120] sm:$0xff]
      %v1198 = vld [vmem:[%s6 + $0x128] sm:$0xff]
      %v1199 = vld [vmem:[%s6 + $0x130] sm:$0xff]
      %v1200 = vld [vmem:[%s6 + $0x138] sm:$0xff]
      %v1201 = vld [vmem:[%s6 + $0x140] sm:$0xff]
      %v1202 = vld [vmem:[%s6 + $0x148] sm:$0xff]
      %v1203 = vld [vmem:[%s6 + $0x150] sm:$0xff]
      %v1204 = vld [vmem:[%s6 + $0x158] sm:$0xff]
      %v1205 = vld [vmem:[%s6 + $0x160] sm:$0xff]
      %v1206 = vld [vmem:[%s6 + $0x168] sm:$0xff]
      %v1207 = vld [vmem:[%s6 + $0x170] sm:$0xff]
      %v1208 = vld [vmem:[%s6 + $0x178] sm:$0xff]
      %v1209 = vld [vmem:[%s6 + $0x180] sm:$0xff]
      %v1210 = vld [vmem:[%s6 + $0x188] sm:$0xff]
      %v1211 = vld [vmem:[%s6 + $0x190] sm:$0xff]
      %v1212 = vld [vmem:[%s6 + $0x198] sm:$0xff]
      %v1213 = vld [vmem:[%s6 + $0x1a0] sm:$0xff]
      %v1214 = vld [vmem:[%s6 + $0x1a8] sm:$0xff]
      %v1215 = vld [vmem:[%s6 + $0x1b0] sm:$0xff]
      %v1216 = vld [vmem:[%s6 + $0x1b8] sm:$0xff]
      %v1217 = vld [vmem:[%s6 + $0x1c0] sm:$0xff]
      %v1218 = vld [vmem:[%s6 + $0x1c8] sm:$0xff]
      %v1219 = vld [vmem:[%s6 + $0x1d0] sm:$0xff]
      %v1220 = vld [vmem:[%s6 + $0x1d8] sm:$0xff]
      %v1221 = vld [vmem:[%s6 + $0x1e0] sm:$0xff]
      %v1222 = vld [vmem:[%s6 + $0x1e8] sm:$0xff]
      %v1223 = vld [vmem:[%s6 + $0x1f0] sm:$0xff]
      %v1224 = vld [vmem:[%s6 + $0x1f8] sm:$0xff]
      %1225 = vmatprep.subr.mxu0 0.0
      %1226 = vmatpush1.msra.mxu0 %v1176
      %1227 = vmatprep.subr.mxu0 0.0
      %1228 = vmatpush1.msra.mxu0 %v1175
      %1229 = vmatprep.subr.mxu0 0.0
      %1230 = vmatpush1.msra.mxu0 %v1174
      %1231 = vmatprep.subr.mxu0 0.0
      %1232 = vmatpush1.msra.mxu0 %v1173
      %1233 = vmatprep.subr.mxu0 0.0
      %1234 = vmatpush1.msra.mxu0 %v1172
      %1235 = vmatprep.subr.mxu0 0.0
      %1236 = vmatpush1.msra.mxu0 %v1171
      %1237 = vmatprep.subr.mxu0 0.0
      %1238 = vmatpush1.msra.mxu0 %v1170
      %1239 = vmatprep.subr.mxu0 0.0
      %1240 = vmatpush1.msra.mxu0 %v1169
      %1241 = vmatprep.subr.mxu0 0.0
      %1242 = vmatpush1.msra.mxu0 %v1168
      %1243 = vmatprep.subr.mxu0 0.0
      %1244 = vmatpush1.msra.mxu0 %v1167
      %1245 = vmatprep.subr.mxu0 0.0
      %1246 = vmatpush1.msra.mxu0 %v1166
      %1247 = vmatprep.subr.mxu0 0.0
      %1248 = vmatpush1.msra.mxu0 %v1165
      %1249 = vmatprep.subr.mxu0 0.0
      %1250 = vmatpush1.msra.mxu0 %v1164
      %1251 = vmatprep.subr.mxu0 0.0
      %1252 = vmatpush1.msra.mxu0 %v1163
      %1253 = vmatprep.subr.mxu0 0.0
      %1254 = vmatpush1.msra.mxu0 %v1162
      %1255 = vmatprep.subr.mxu0 0.0
      %1256 = vmatpush1.msra.mxu0 %v1161
      %1257 = vmatprep.subr.mxu0 0.0
      %1258 = vmatpush2.msra.mxu0 %v1192
      %1259 = vmatprep.subr.mxu0 0.0
      %1260 = vmatpush2.msra.mxu0 %v1191
      %1261 = vmatprep.subr.mxu0 0.0
      %1262 = vmatpush2.msra.mxu0 %v1190
      %1263 = vmatprep.subr.mxu0 0.0
      %1264 = vmatpush2.msra.mxu0 %v1189
      %1265 = vmatprep.subr.mxu0 0.0
      %1266 = vmatpush2.msra.mxu0 %v1188
      %1267 = vmatprep.subr.mxu0 0.0
      %1268 = vmatpush2.msra.mxu0 %v1187
      %1269 = vmatprep.subr.mxu0 0.0
      %1270 = vmatpush2.msra.mxu0 %v1186
      %1271 = vmatprep.subr.mxu0 0.0
      %1272 = vmatpush2.msra.mxu0 %v1185
      %1273 = vmatprep.subr.mxu0 0.0
      %1274 = vmatpush2.msra.mxu0 %v1184
      %1275 = vmatprep.subr.mxu0 0.0
      %1276 = vmatpush2.msra.mxu0 %v1183
      %1277 = vmatprep.subr.mxu0 0.0
      %1278 = vmatpush2.msra.mxu0 %v1182
      %1279 = vmatprep.subr.mxu0 0.0
      %1280 = vmatpush2.msra.mxu0 %v1181
      %1281 = vmatprep.subr.mxu0 0.0
      %1282 = vmatpush2.msra.mxu0 %v1180
      %1283 = vmatprep.subr.mxu0 0.0
      %1284 = vmatpush2.msra.mxu0 %v1179
      %1285 = vmatprep.subr.mxu0 0.0
      %1286 = vmatpush2.msra.mxu0 %v1178
      %1287 = vmatprep.subr.mxu0 0.0
      %1288 = vmatpush2.msra.mxu0 %v1177
      %1289 = vmatprep.mubr.f32.mxu0 %v1146
      %1290 = vmatmul.mubr.f32.gmra.mxu0 %v1139
      %v1291 = vpop.f32.mrf.mxu0
      %v1292 = vadd.f32 0.0, %v1291
      %v1293 = vpop.f32.mrf.mxu0
      %1294 = vdwg.mxu0
      %1295 = vmatprep.subr.mxu0 0.0
      %1296 = vmatpush1.msra.mxu0 %v1208
      %1297 = vmatprep.subr.mxu0 0.0
      %1298 = vmatpush1.msra.mxu0 %v1207
      %1299 = vmatprep.subr.mxu0 0.0
      %1300 = vmatpush1.msra.mxu0 %v1206
      %1301 = vmatprep.subr.mxu0 0.0
      %1302 = vmatpush1.msra.mxu0 %v1205
      %1303 = vmatprep.subr.mxu0 0.0
      %1304 = vmatpush1.msra.mxu0 %v1204
      %1305 = vmatprep.subr.mxu0 0.0
      %1306 = vmatpush1.msra.mxu0 %v1203
      %1307 = vmatprep.subr.mxu0 0.0
      %1308 = vmatpush1.msra.mxu0 %v1202
      %1309 = vmatprep.subr.mxu0 0.0
      %1310 = vmatpush1.msra.mxu0 %v1201
      %1311 = vmatprep.subr.mxu0 0.0
      %1312 = vmatpush1.msra.mxu0 %v1200
      %1313 = vmatprep.subr.mxu0 0.0
      %1314 = vmatpush1.msra.mxu0 %v1199
      %1315 = vmatprep.subr.mxu0 0.0
      %1316 = vmatpush1.msra.mxu0 %v1198
      %1317 = vmatprep.subr.mxu0 0.0
      %1318 = vmatpush1.msra.mxu0 %v1197
      %1319 = vmatprep.subr.mxu0 0.0
      %1320 = vmatpush1.msra.mxu0 %v1196
      %1321 = vmatprep.subr.mxu0 0.0
      %1322 = vmatpush1.msra.mxu0 %v1195
      %1323 = vmatprep.subr.mxu0 0.0
      %1324 = vmatpush1.msra.mxu0 %v1194
      %1325 = vmatprep.subr.mxu0 0.0
      %1326 = vmatpush1.msra.mxu0 %v1193
      %1327 = vmatprep.subr.mxu0 0.0
      %1328 = vmatpush2.msra.mxu0 %v1224
      %1329 = vmatprep.subr.mxu0 0.0
      %1330 = vmatpush2.msra.mxu0 %v1223
      %1331 = vmatprep.subr.mxu0 0.0
      %1332 = vmatpush2.msra.mxu0 %v1222
      %1333 = vmatprep.subr.mxu0 0.0
      %1334 = vmatpush2.msra.mxu0 %v1221
      %1335 = vmatprep.subr.mxu0 0.0
      %1336 = vmatpush2.msra.mxu0 %v1220
      %1337 = vmatprep.subr.mxu0 0.0
      %1338 = vmatpush2.msra.mxu0 %v1219
      %1339 = vmatprep.subr.mxu0 0.0
      %1340 = vmatpush2.msra.mxu0 %v1218
      %1341 = vmatprep.subr.mxu0 0.0
      %1342 = vmatpush2.msra.mxu0 %v1217
      %1343 = vmatprep.subr.mxu0 0.0
      %1344 = vmatpush2.msra.mxu0 %v1216
      %1345 = vmatprep.subr.mxu0 0.0
      %1346 = vmatpush2.msra.mxu0 %v1215
      %1347 = vmatprep.subr.mxu0 0.0
      %1348 = vmatpush2.msra.mxu0 %v1214
      %1349 = vmatprep.subr.mxu0 0.0
      %1350 = vmatpush2.msra.mxu0 %v1213
      %1351 = vmatprep.subr.mxu0 0.0
      %1352 = vmatpush2.msra.mxu0 %v1212
      %1353 = vmatprep.subr.mxu0 0.0
      %1354 = vmatpush2.msra.mxu0 %v1211
      %1355 = vmatprep.subr.mxu0 0.0
      %1356 = vmatpush2.msra.mxu0 %v1210
      %1357 = vmatprep.subr.mxu0 0.0
      %1358 = vmatpush2.msra.mxu0 %v1209
      %1359 = vmatprep.mubr.f32.mxu0 %v1160
      %1360 = vmatmul.mubr.f32.gmra.mxu0 %v1153
      %v1361 = vpop.f32.mrf.mxu0
      %v1362 = vadd.f32 %v1292, %v1361
      %v1363 = vpop.f32.mrf.mxu0
      %1364 = vdwg.mxu0
      %v1365 = vmul.f32 %v1362, 0.2
      %v1366 = vmax.f32 %v1362, %v1365
      %v1367 = vpack.c.bf16 %v1366, %v1366
      %v1368 = vld [vmem:[%s7] sm:$0xf]
      %v1369 = vld [vmem:[%s7 + $0x4] sm:$0xf]
      %v1370 = vld [vmem:[%s7 + $0x8] sm:$0xf]
      %v1371 = vld [vmem:[%s7 + $0xc] sm:$0xf]
      %v1372 = vld [vmem:[%s8] sm:$0x1]
      %v1377 = vunpack.c.l.b16 %v1368
      %v1378 = vunpack.c.l.b16 %v1369
      %v1379 = vunpack.c.l.b16 %v1370
      %v1380 = vunpack.c.l.b16 %v1371
      %v1381 = vpack.c.b16 %v1378, %v1377
      %v1382 = vpack.c.b16 %v1380, %v1379
      %v1386 = vsel %vm374, %v1367, 0
      %1388 = vmatprep.subr.bf16.mxu0 0
      %1389 = vmatpush1.bf16.msra.mxu0 0
      %1390 = vmatprep.subr.bf16.mxu0 0
      %1391 = vmatpush1.bf16.msra.mxu0 0
      %1392 = vmatprep.subr.bf16.mxu0 0
      %1393 = vmatpush1.bf16.msra.mxu0 0
      %1394 = vmatprep.subr.bf16.mxu0 0
      %1395 = vmatpush1.bf16.msra.mxu0 0
      %1396 = vmatprep.subr.bf16.mxu0 0
      %1397 = vmatpush1.bf16.msra.mxu0 0
      %1398 = vmatprep.subr.bf16.mxu0 0
      %1399 = vmatpush1.bf16.msra.mxu0 0
      %1400 = vmatprep.subr.bf16.mxu0 0
      %1401 = vmatpush1.bf16.msra.mxu0 %v1382
      %1402 = vmatprep.subr.bf16.mxu0 0
      %1403 = vmatpush1.bf16.msra.mxu0 %v1381
      %1404 = vmatprep.subr.bf16.mxu0 0
      %1405 = vmatpush2.bf16.msra.mxu0 0
      %1406 = vmatprep.subr.bf16.mxu0 0
      %1407 = vmatpush2.bf16.msra.mxu0 0
      %1408 = vmatprep.subr.bf16.mxu0 0
      %1409 = vmatpush2.bf16.msra.mxu0 0
      %1410 = vmatprep.subr.bf16.mxu0 0
      %1411 = vmatpush2.bf16.msra.mxu0 0
      %1412 = vmatprep.subr.bf16.mxu0 0
      %1413 = vmatpush2.bf16.msra.mxu0 0
      %1414 = vmatprep.subr.bf16.mxu0 0
      %1415 = vmatpush2.bf16.msra.mxu0 0
      %1416 = vmatprep.subr.bf16.mxu0 0
      %1417 = vmatpush2.bf16.msra.mxu0 0
      %1418 = vmatprep.subr.bf16.mxu0 0
      %1419 = vmatpush2.bf16.msra.mxu0 0
      %1420 = vmatprep.mubr.bf16.mxu0 0
      %1421 = vmatmul.mubr.bf16.gmra.mxu0 %v1386
      %v1422 = vpop.f32.mrf.mxu0
      %v1423 = vadd.f32 %v1372, %v1422
      %v1424 = vpop.f32.mrf.mxu0
      %v1425 = vpop.f32.mrf.mxu0
      %v1426 = vpop.f32.mrf.mxu0
      %1427 = vdwg.mxu0
      %1428 = vst [vmem:[%s328] sm:$0x1] %v1423
      %p1429 = scmp.lt.s32.totalorder %s20, 1
      %s1430 = scalar_select %p1429, %s20, 1
      %s1431 = scalar_lea.vmem %s9, %s1430
      // Predicated region
      $region57: #{fused_forward.1} parent=55 // pred_check
        %p1432 = pneg %p232
      $region58: #{fused_forward.1} parent=55 // pred_check_branch
        %1434 = sbr.rel (%p1432) target = $region60
      $region59: #{fused_forward.1} parent=55 // pred_region
        _
      $region60: #{fused_forward.1} parent=55 // pred_fallthru
        _
    $region56: #{fused_forward.1} parent=5 // pred_fallthru
      _
    %p1435 = scmp.le.s32.totalorder 2, %s15
    // Predicated region
    $region61: #{fused_forward.1} parent=5 // pred_check
      %p1436 = pneg %p1435
    $region62: #{fused_forward.1} parent=5 // pred_check_branch
      %1438 = sbr.rel (%p1436) target = $region64
    $region63: #{fused_forward.1} parent=5 // pred_region
      %s1439 = ssub.s32 %s15, 2
      // Predicated region
      $region65: #{fused_forward.1} parent=63 // pred_check
        %p1440 = pneg %p238
      $region66: #{fused_forward.1} parent=63 // pred_check_branch
        %1442 = sbr.rel (%p1440) target = $region68
      $region67: #{fused_forward.1} parent=63 // pred_region
        %p1443 = scmp.lt.s32.totalorder %s21, 1
        %s1444 = scalar_select %p1443, %s21, 1
        %s1445 = scalar_lea.vmem %s9, %s1444
      $region68: #{fused_forward.1} parent=63 // pred_fallthru
        _
    $region64: #{fused_forward.1} parent=5 // pred_fallthru
      _
  $region6: #{fused_forward.1} parent=0 // loop_footer
    %s19 = sadd.s32 1, %s15
  $region7: #{fused_forward.1} parent=0 // loop_footer_branch
    %14 = sbr.rel target = $region3
  $region8: #{fused_forward.1} parent=0 // loop_exit
    _

</llo_original>
